<compile_context>
chip_gen: v6e
topology: v6e:2x2x1
jax: 0.10.0
libtpu: 0.0.40
codegen_flags: <defaults>
</compile_context>

<pallas_src>
import functools

import numpy as np
import jax
import jax.numpy as jnp
from jax.experimental import pallas as pl
from jax.experimental.pallas import tpu as pltpu


# ----------------------------- host-side parameter setup --------------------
def get_wavelength(energy_kev):
    # X-ray wavelength in mm for photon energy in keV.
    h = 6.62607004e-34
    c = 299792458.0
    e = 1.6021766208e-19
    return (h * c) / (energy_kev * 1e3 * e) * 1e3


def get_freqcoord(N_y, N_x, pix_wid):
    fy = np.fft.fftfreq(N_y, d=pix_wid)
    fx = np.fft.fftfreq(N_x, d=pix_wid)
    y_coord, x_coord = np.meshgrid(fy, fx, indexing="ij")
    return y_coord, x_coord


def _round_up(v, m):
    return ((v + m - 1) // m) * m


# --------------------------------- Pallas kernel -----------------------------
def _ctf_kernel(x_ref, cy_ref, sy_ref, csx_ref, ics_ref, pfil_ref, qfil_ref,
                ph_ref, ab_ref, zp_ref, zq_ref, *, kp):
    # grid = (batch, distance); distance is the (innermost) reduction axis.
    d = pl.program_id(1)
    last_d = pl.num_programs(1) - 1

    def mm(a, b):
        return jnp.dot(a, b, preferred_element_type=jnp.float32)

    def b16(v):
        return v.astype(jnp.bfloat16)

    cy = cy_ref[...]                           # (Ny, Ny) bf16
    sy = sy_ref[...]                           # (Ny, Ny) bf16

    # ---- forward half-spectrum 2-D DFT of this distance's plane (packed) ----
    # csx = [Cx | Sx]  (Nx, 2Kp):  one matmul gives both cos and sin columns.
    xcs = b16(mm(x_ref[...], csx_ref[...]))    # (Ny, 2Kp) = [x@Cx | x@Sx]
    yc = mm(cy, xcs)                           # [Cy xc | Cy xs]  f32
    ys = mm(sy, xcs)                           # [Sy xc | Sy xs]  f32
    re = yc[:, :kp] - ys[:, kp:]               # Re  FFT2(x_d)[:, :Kp]
    imn = ys[:, :kp] + yc[:, kp:]              # -Im FFT2(x_d)[:, :Kp]
    cs = jnp.concatenate([re, imn], axis=-1)   # (Ny, 2Kp) packed [Re | -Im]

    @pl.when(d == 0)
    def _():
        zp_ref[...] = jnp.zeros_like(zp_ref)
        zq_ref[...] = jnp.zeros_like(zq_ref)

    # Filters arrive pre-packed as [P_d | P_d] / [Q_d | Q_d] (bf16, promoted to
    # f32 for the accumulate); accumulators hold [Z_re | -Z_im].
    zp_ref[...] += pfil_ref[...].astype(jnp.float32) * cs
    zq_ref[...] += qfil_ref[...].astype(jnp.float32) * cs

    # ---- inverse real 2-D DFT of both Hermitian half spectra (fused) --------
    @pl.when(d == last_d)
    def _():
        # zall = [Zp_re | Wp | Zq_re | Wq],  W = -Z_im.
        zall = b16(jnp.concatenate([zp_ref[...], zq_ref[...]], axis=-1))
        tc = mm(cy, zall)                      # (Ny, 4Kp) f32
        ts = mm(sy, zall)                      # (Ny, 4Kp) f32
        ics = ics_ref[...]                     # (2Kp, Nx) = vstack(ICx, -ISx)
        # t1 = Cy@Z_re - Sy@Z_im = Cy@Z_re + Sy@W ;  t2 = Sy@Z_re - Cy@W
        t1p = tc[:, 0 * kp:1 * kp] + ts[:, 1 * kp:2 * kp]
        t2p = ts[:, 0 * kp:1 * kp] - tc[:, 1 * kp:2 * kp]
        t1q = tc[:, 2 * kp:3 * kp] + ts[:, 3 * kp:4 * kp]
        t2q = ts[:, 2 * kp:3 * kp] - tc[:, 3 * kp:4 * kp]
        # Output is real by construction (real filter * Hermitian spectrum),
        # which replaces the module's torch.isclose(imag, 0) assertion.
        ph_ref[...] = mm(b16(jnp.concatenate([t1p, t2p], axis=-1)),
                         ics).astype(ph_ref.dtype)
        ab_ref[...] = mm(b16(jnp.concatenate([t1q, t2q], axis=-1)),
                         ics).astype(ab_ref.dtype)


# --------------------------------- module wrapper -----------------------------
class CTFTranPallas:
    def __init__(self, N_y, N_x, pix_wid, energy, prop_dists,
                 reg_par=None, rel_reg_par=None):
        assert not (reg_par is not None and rel_reg_par is not None)
        self.N_y, self.N_x = int(N_y), int(N_x)
        dists = np.asarray(prop_dists, dtype=np.float64)
        self.n_dists = int(dists.shape[0])
        wlength = get_wavelength(energy)

        y_coord, x_coord = get_freqcoord(N_y, N_x, pix_wid)
        xy2 = x_coord ** 2 + y_coord ** 2                       # (Ny, Nx)
        arg = np.pi * wlength * dists[:, None, None] * xy2      # (D, Ny, Nx)
        cosv = np.cos(arg)
        sinv = np.sin(arg)
        A = np.sum(sinv * cosv, axis=0)
        B = np.sum(sinv * sinv, axis=0)
        C = np.sum(cosv * cosv, axis=0)
        Delta = B * C - A * A
        if reg_par is not None:
            out_scale = 1.0 / (2.0 * Delta + reg_par)
        elif rel_reg_par is not None:
            reg_par = rel_reg_par * np.max(2.0 * Delta)
            out_scale = 1.0 / (2.0 * Delta + reg_par)
        else:
            # NOTE: like the PyTorch module, this divides by zero at the DC
            # frequency when no regularization is supplied.
            out_scale = 1.0 / (2.0 * Delta)

        # float64 copies kept only for the self-check reference.
        self.cosv64, self.sinv64 = cosv, sinv
        self.A64, self.B64, self.C64, self.out_scale64 = A, B, C, out_scale

        # Per-distance real frequency filters; phase sign and the 1/(Ny*Nx)
        # IFFT normalization folded in on the host.
        inv_n = 1.0 / (N_y * N_x)
        P = -out_scale[None] * (C[None] * sinv - A[None] * cosv) * inv_n
        Q = out_scale[None] * (A[None] * sinv - B[None] * cosv) * inv_n

        # Half-spectrum (rfft-style) bases; pad Kx up to a lane multiple.
        Kx = N_x // 2 + 1
        Kp = min(N_x, _round_up(Kx, 128))
        self._kpad = Kp

        m_y = np.arange(N_y)
        ang_y = 2.0 * np.pi * np.outer(m_y, m_y) / N_y
        Cy, Sy = np.cos(ang_y), np.sin(ang_y)                   # symmetric

        m_x = np.arange(N_x)
        k_x = np.arange(Kp)
        ang_f = 2.0 * np.pi * np.outer(m_x, k_x) / N_x          # (Nx, Kp)
        Cxh, Sxh = np.cos(ang_f), np.sin(ang_f)
        Cxh[:, Kx:] = 0.0
        Sxh[:, Kx:] = 0.0
        CSx = np.concatenate([Cxh, Sxh], axis=1)                # (Nx, 2Kp)

        # Inverse basis with Hermitian fold-back weights (1, 2, ..., 2, 1),
        # stacked as ICS = vstack(ICx, -ISx) so the inverse right stage is a
        # single matmul on packed [t1 | t2].
        w = np.full((Kp,), 2.0)
        w[0] = 1.0
        if N_x % 2 == 0:
            w[N_x // 2] = 1.0
        w[Kx:] = 0.0
        ang_i = 2.0 * np.pi * np.outer(k_x, m_x) / N_x          # (Kp, Nx)
        ICx = w[:, None] * np.cos(ang_i)
        ISx = w[:, None] * np.sin(ang_i)
        ICS = np.concatenate([ICx, -ISx], axis=0)               # (2Kp, Nx)

        # Filters packed as [P_d | P_d] / [Q_d | Q_d] to match the packed
        # [Re | -Im] spectrum accumulators.
        Ph = np.zeros((self.n_dists, N_y, Kp))
        Qh = np.zeros((self.n_dists, N_y, Kp))
        Ph[:, :, :Kx] = P[:, :, :Kx]
        Qh[:, :, :Kx] = Q[:, :, :Kx]
        Pk = np.concatenate([Ph, Ph], axis=-1)                  # (D, Ny, 2Kp)
        Qk = np.concatenate([Qh, Qh], axis=-1)

        bf = lambda a: jnp.asarray(a, jnp.bfloat16)
        self._consts = (bf(Cy), bf(Sy), bf(CSx), bf(ICS), bf(Pk), bf(Qk))

    # ------------------------------ VMEM budgeting ---------------------------
    def _vmem_cap_bytes(self):
        try:
            return int(pltpu.get_tpu_info().vmem_capacity_bytes)
        except Exception:
            return 64 << 20        # safe on every generation (v7x physical)

    def _vmem_limit_bytes(self):
        Ny, Nx, Kp = self.N_y, self.N_x, self._kpad
        bases = (2 * Ny * Ny + Nx * 2 * Kp + 2 * Kp * Nx) * 2   # bf16, 1-buffered
        x_blk = 2 * Ny * Nx * 2                                  # bf16, 2-buffered
        fil_blk = 2 * 2 * Ny * 2 * Kp * 2                        # P,Q bf16, 2-buffered
        out_blk = 2 * 2 * Ny * Nx * 4                            # 2 f32 outputs
        scratch = 2 * Ny * 2 * Kp * 4                            # zp, zq accumulators
        live = 14 * Ny * 2 * Kp * 4                              # in-flight intermediates
        est = bases + x_blk + fil_blk + out_blk + scratch + live + (4 << 20)
        cap = self._vmem_cap_bytes() - (8 << 20)
        return int(min(cap, max(16 << 20, est)))

    # ------------------------------ pallas_call ------------------------------
    def _call(self, xb, single_buffer_consts):
        N_y, N_x, Kp, D = self.N_y, self.N_x, self._kpad, self.n_dists
        Bsz = xb.shape[0]

        def const_spec(shape):
            kwargs = {}
            if single_buffer_consts:
                kwargs["pipeline_mode"] = pl.Buffered(buffer_count=1)
            return pl.BlockSpec(shape, lambda b, d: (0,) * len(shape), **kwargs)

        kern = functools.partial(_ctf_kernel, kp=Kp)
        ph, ab = pl.pallas_call(
            kern,
            out_shape=(jax.ShapeDtypeStruct((Bsz, N_y, N_x), jnp.float32),
                       jax.ShapeDtypeStruct((Bsz, N_y, N_x), jnp.float32)),
            grid_spec=pltpu.PrefetchScalarGridSpec(
                num_scalar_prefetch=0,
                grid=(Bsz, D),
                in_specs=[
                    pl.BlockSpec((None, None, N_y, N_x),
                                 lambda b, d: (b, d, 0, 0)),        # x (bf16)
                    const_spec((N_y, N_y)),                          # Cy
                    const_spec((N_y, N_y)),                          # Sy
                    const_spec((N_x, 2 * Kp)),                       # [Cx|Sx]
                    const_spec((2 * Kp, N_x)),                       # ICS
                    pl.BlockSpec((None, N_y, 2 * Kp),
                                 lambda b, d: (d, 0, 0)),            # P packed
                    pl.BlockSpec((None, N_y, 2 * Kp),
                                 lambda b, d: (d, 0, 0)),            # Q packed
                ],
                out_specs=(
                    pl.BlockSpec((None, N_y, N_x), lambda b, d: (b, 0, 0)),
                    pl.BlockSpec((None, N_y, N_x), lambda b, d: (b, 0, 0)),
                ),
                scratch_shapes=[pltpu.VMEM((N_y, 2 * Kp), jnp.float32),
                                pltpu.VMEM((N_y, 2 * Kp), jnp.float32)],
            ),
            compiler_params=pltpu.CompilerParams(
                dimension_semantics=("parallel", "arbitrary"),
                vmem_limit_bytes=self._vmem_limit_bytes()),
        )(xb, *self._consts)
        return ph, ab

    def forward(self, x):
        assert x.ndim == 4 and x.shape[1] == self.n_dists
        assert x.shape[2] == self.N_y and x.shape[3] == self.N_x
        xb = x.astype(jnp.bfloat16)          # ship x as bf16 (half the DMA)
        try:
            out = self._call(xb, single_buffer_consts=True)
            jax.block_until_ready(out)
            return out
        except Exception:
            # Fallback if single-buffered constants are unsupported on this
            # jax build: identical kernel with default double-buffering.
            return self._call(xb, single_buffer_consts=False)


# ------------------------------ numpy reference (self-check) -----------------
def reference_forward_np(x, sinv, cosv, A, B, C, out_scale):
    X = np.fft.fft2(np.asarray(x, np.float64), axes=(-2, -1))   # (B, D, Ny, Nx)
    Isin = np.sum(X * sinv[None], axis=1)
    Icos = np.sum(X * cosv[None], axis=1)
    phase = out_scale[None] * (C[None] * Isin - A[None] * Icos)
    phase = -np.real(np.fft.ifft2(phase, axes=(-2, -1)))
    absorp = out_scale[None] * (A[None] * Isin - B[None] * Icos)
    absorp = np.real(np.fft.ifft2(absorp, axes=(-2, -1)))
    return phase, absorp


# --------------------------------------- main --------------------------------
if __name__ == "__main__":
    B, D, N_y, N_x = 2, 2, 16, 16        # B=2 keeps both v7x TensorCores busy
    pix_wid = 1e-3               # mm
    energy = 20.0                # keV
    prop_dists = [10.0, 30.0]    # mm

    model = CTFTranPallas(N_y, N_x, pix_wid, energy, prop_dists,
                          reg_par=None, rel_reg_par=1e-2)

    key = jax.random.PRNGKey(0)
    x = jax.random.uniform(key, (B, D, N_y, N_x), dtype=jnp.float32,
                           minval=0.5, maxval=1.5)

    ph, ab = model.forward(x)
    ph = jax.block_until_ready(ph)
    ab = jax.block_until_ready(ab)

    ph_ref, ab_ref = reference_forward_np(np.asarray(x), model.sinv64,
                                          model.cosv64, model.A64, model.B64,
                                          model.C64, model.out_scale64)
    ph_err = float(np.max(np.abs(np.asarray(ph, np.float64) - ph_ref)))
    ab_err = float(np.max(np.abs(np.asarray(ab, np.float64) - ab_ref)))
    ph_tol = 5e-2 * float(np.max(np.abs(ph_ref))) + 1e-3
    ab_tol = 5e-2 * float(np.max(np.abs(ab_ref))) + 1e-3
    assert ph_err <= ph_tol, ("phase mismatch", ph_err, ph_tol)
    assert ab_err <= ab_tol, ("absorp mismatch", ab_err, ab_tol)

    print("KERNEL_OK")
</pallas_src>

<mosaic_0001>
module attributes {stable_mosaic.version = 11 : i64} {
  func.func @_ctf_kernel(%arg0: i32, %arg1: i32, %arg2: memref<1x1x16x16xbf16, #tpu.memory_space<vmem>>, %arg3: memref<16x16xbf16, #tpu.memory_space<vmem>>, %arg4: memref<16x16xbf16, #tpu.memory_space<vmem>>, %arg5: memref<16x32xbf16, #tpu.memory_space<vmem>>, %arg6: memref<32x16xbf16, #tpu.memory_space<vmem>>, %arg7: memref<1x16x32xbf16, #tpu.memory_space<vmem>>, %arg8: memref<1x16x32xbf16, #tpu.memory_space<vmem>>, %arg9: memref<1x16x16xf32, #tpu.memory_space<vmem>>, %arg10: memref<1x16x16xf32, #tpu.memory_space<vmem>>, %arg11: memref<16x32xf32, #tpu.memory_space<vmem>>, %arg12: memref<16x32xf32, #tpu.memory_space<vmem>>) attributes {dimension_semantics = [#tpu.dimension_semantics<parallel>, #tpu.dimension_semantics<arbitrary>], iteration_bounds = array<i64: 2, 2>, scalar_prefetch = 0 : i64, scratch_operands = 2 : i64, tpu.core_type = #tpu.core_type<tc>, window_params = [{transform_indices = @transform_0, window_bounds = array<i64: 1, 1, 16, 16>}, {pipeline_mode = #tpu.pipeline_mode<synchronous>, transform_indices = @transform_1, window_bounds = array<i64: 16, 16>}, {pipeline_mode = #tpu.pipeline_mode<synchronous>, transform_indices = @transform_2, window_bounds = array<i64: 16, 16>}, {pipeline_mode = #tpu.pipeline_mode<synchronous>, transform_indices = @transform_3, window_bounds = array<i64: 16, 32>}, {pipeline_mode = #tpu.pipeline_mode<synchronous>, transform_indices = @transform_4, window_bounds = array<i64: 32, 16>}, {transform_indices = @transform_5, window_bounds = array<i64: 1, 16, 32>}, {transform_indices = @transform_6, window_bounds = array<i64: 1, 16, 32>}, {transform_indices = @transform_7, window_bounds = array<i64: 1, 16, 16>}, {transform_indices = @transform_8, window_bounds = array<i64: 1, 16, 16>}]} {
    %c0 = arith.constant 0 : index
    %c0_0 = arith.constant 0 : index
    %0 = vector.load %arg3[%c0, %c0_0] : memref<16x16xbf16, #tpu.memory_space<vmem>>, vector<16x16xbf16>
    %c0_1 = arith.constant 0 : index
    %c0_2 = arith.constant 0 : index
    %1 = vector.load %arg4[%c0_1, %c0_2] : memref<16x16xbf16, #tpu.memory_space<vmem>>, vector<16x16xbf16>
    %c0_3 = arith.constant 0 : index
    %c0_4 = arith.constant 0 : index
    %c0_5 = arith.constant 0 : index
    %c0_6 = arith.constant 0 : index
    %2 = vector.load %arg2[%c0_3, %c0_4, %c0_5, %c0_6] : memref<1x1x16x16xbf16, #tpu.memory_space<vmem>>, vector<1x1x16x16xbf16>
    %3 = vector.shape_cast %2 : vector<1x1x16x16xbf16> to vector<16x16xbf16>
    %c0_7 = arith.constant 0 : index
    %c0_8 = arith.constant 0 : index
    %4 = vector.load %arg5[%c0_7, %c0_8] : memref<16x32xbf16, #tpu.memory_space<vmem>>, vector<16x32xbf16>
    %cst = arith.constant dense<0.000000e+00> : vector<16x32xf32>
    %5 = tpu.matmul %3, %4, %cst {dimension_numbers = #tpu.dot_dimension_numbers<[1], [0], [0], [1], [0, 0, 1, 1], [], []>} : vector<16x16xbf16>, vector<16x32xbf16>, vector<16x32xf32> -> vector<16x32xf32>
    %6 = arith.truncf %5 : vector<16x32xf32> to vector<16x32xbf16>
    %cst_9 = arith.constant dense<0.000000e+00> : vector<16x32xf32>
    %7 = tpu.matmul %0, %6, %cst_9 {dimension_numbers = #tpu.dot_dimension_numbers<[1], [0], [0], [1], [0, 0, 1, 1], [], []>} : vector<16x16xbf16>, vector<16x32xbf16>, vector<16x32xf32> -> vector<16x32xf32>
    %cst_10 = arith.constant dense<0.000000e+00> : vector<16x32xf32>
    %8 = tpu.matmul %1, %6, %cst_10 {dimension_numbers = #tpu.dot_dimension_numbers<[1], [0], [0], [1], [0, 0, 1, 1], [], []>} : vector<16x16xbf16>, vector<16x32xbf16>, vector<16x32xf32> -> vector<16x32xf32>
    %9 = vector.extract_strided_slice %7 {offsets = [0, 0], sizes = [16, 16], strides = [1, 1]} : vector<16x32xf32> to vector<16x16xf32>
    %10 = vector.extract_strided_slice %8 {offsets = [0, 16], sizes = [16, 16], strides = [1, 1]} : vector<16x32xf32> to vector<16x16xf32>
    %11 = arith.subf %9, %10 : vector<16x16xf32>
    %12 = vector.extract_strided_slice %8 {offsets = [0, 0], sizes = [16, 16], strides = [1, 1]} : vector<16x32xf32> to vector<16x16xf32>
    %13 = vector.extract_strided_slice %7 {offsets = [0, 16], sizes = [16, 16], strides = [1, 1]} : vector<16x32xf32> to vector<16x16xf32>
    %14 = arith.addf %12, %13 : vector<16x16xf32>
    %15 = tpu.concatenate %11, %14 in 1 : vector<16x16xf32>, vector<16x16xf32> -> vector<16x32xf32>
    %c0_i32 = arith.constant 0 : i32
    %16 = arith.cmpi eq, %arg1, %c0_i32 : i32
    %17 = arith.extui %16 : i1 to i32
    %c0_i32_11 = arith.constant 0 : i32
    %18 = arith.cmpi ne, %17, %c0_i32_11 : i32
    scf.if %18 {
      %cst_27 = arith.constant 0.000000e+00 : f32
      %36 = vector.broadcast %cst_27 : f32 to vector<16x32xf32>
      %c0_28 = arith.constant 0 : index
      %c0_29 = arith.constant 0 : index
      %37 = vector.load %arg11[%c0_28, %c0_29] : memref<16x32xf32, #tpu.memory_space<vmem>>, vector<16x32xf32>
      tpu.vector_store %arg11[%c0_28, %c0_29], %36 {strides = array<i32>} : memref<16x32xf32, #tpu.memory_space<vmem>>, vector<16x32xf32>,
      %cst_30 = arith.constant 0.000000e+00 : f32
      %38 = vector.broadcast %cst_30 : f32 to vector<16x32xf32>
      %c0_31 = arith.constant 0 : index
      %c0_32 = arith.constant 0 : index
      %39 = vector.load %arg12[%c0_31, %c0_32] : memref<16x32xf32, #tpu.memory_space<vmem>>, vector<16x32xf32>
      tpu.vector_store %arg12[%c0_31, %c0_32], %38 {strides = array<i32>} : memref<16x32xf32, #tpu.memory_space<vmem>>, vector<16x32xf32>,
    } else {
    }
    %c0_12 = arith.constant 0 : index
    %c0_13 = arith.constant 0 : index
    %19 = vector.load %arg11[%c0_12, %c0_13] : memref<16x32xf32, #tpu.memory_space<vmem>>, vector<16x32xf32>
    %c0_14 = arith.constant 0 : index
    %c0_15 = arith.constant 0 : index
    %c0_16 = arith.constant 0 : index
    %20 = vector.load %arg7[%c0_14, %c0_15, %c0_16] : memref<1x16x32xbf16, #tpu.memory_space<vmem>>, vector<1x16x32xbf16>
    %21 = vector.shape_cast %20 : vector<1x16x32xbf16> to vector<16x32xbf16>
    %22 = arith.extf %21 : vector<16x32xbf16> to vector<16x32xf32>
    %23 = arith.mulf %22, %15 : vector<16x32xf32>
    %24 = arith.addf %19, %23 : vector<16x32xf32>
    %c0_17 = arith.constant 0 : index
    %c0_18 = arith.constant 0 : index
    %25 = vector.load %arg11[%c0_17, %c0_18] : memref<16x32xf32, #tpu.memory_space<vmem>>, vector<16x32xf32>
    tpu.vector_store %arg11[%c0_17, %c0_18], %24 {strides = array<i32>} : memref<16x32xf32, #tpu.memory_space<vmem>>, vector<16x32xf32>,
    %c0_19 = arith.constant 0 : index
    %c0_20 = arith.constant 0 : index
    %26 = vector.load %arg12[%c0_19, %c0_20] : memref<16x32xf32, #tpu.memory_space<vmem>>, vector<16x32xf32>
    %c0_21 = arith.constant 0 : index
    %c0_22 = arith.constant 0 : index
    %c0_23 = arith.constant 0 : index
    %27 = vector.load %arg8[%c0_21, %c0_22, %c0_23] : memref<1x16x32xbf16, #tpu.memory_space<vmem>>, vector<1x16x32xbf16>
    %28 = vector.shape_cast %27 : vector<1x16x32xbf16> to vector<16x32xbf16>
    %29 = arith.extf %28 : vector<16x32xbf16> to vector<16x32xf32>
    %30 = arith.mulf %29, %15 : vector<16x32xf32>
    %31 = arith.addf %26, %30 : vector<16x32xf32>
    %c0_24 = arith.constant 0 : index
    %c0_25 = arith.constant 0 : index
    %32 = vector.load %arg12[%c0_24, %c0_25] : memref<16x32xf32, #tpu.memory_space<vmem>>, vector<16x32xf32>
    tpu.vector_store %arg12[%c0_24, %c0_25], %31 {strides = array<i32>} : memref<16x32xf32, #tpu.memory_space<vmem>>, vector<16x32xf32>,
    %c1_i32 = arith.constant 1 : i32
    %33 = arith.cmpi eq, %arg1, %c1_i32 : i32
    %34 = arith.extui %33 : i1 to i32
    %c0_i32_26 = arith.constant 0 : i32
    %35 = arith.cmpi ne, %34, %c0_i32_26 : i32
    scf.if %35 {
      %c0_27 = arith.constant 0 : index
      %c0_28 = arith.constant 0 : index
      %36 = vector.load %arg11[%c0_27, %c0_28] : memref<16x32xf32, #tpu.memory_space<vmem>>, vector<16x32xf32>
      %c0_29 = arith.constant 0 : index
      %c0_30 = arith.constant 0 : index
      %37 = vector.load %arg12[%c0_29, %c0_30] : memref<16x32xf32, #tpu.memory_space<vmem>>, vector<16x32xf32>
      %38 = tpu.concatenate %36, %37 in 1 : vector<16x32xf32>, vector<16x32xf32> -> vector<16x64xf32>
      %39 = arith.truncf %38 : vector<16x64xf32> to vector<16x64xbf16>
      %cst_31 = arith.constant dense<0.000000e+00> : vector<16x64xf32>
      %40 = tpu.matmul %0, %39, %cst_31 {dimension_numbers = #tpu.dot_dimension_numbers<[1], [0], [0], [1], [0, 0, 1, 1], [], []>} : vector<16x16xbf16>, vector<16x64xbf16>, vector<16x64xf32> -> vector<16x64xf32>
      %cst_32 = arith.constant dense<0.000000e+00> : vector<16x64xf32>
      %41 = tpu.matmul %1, %39, %cst_32 {dimension_numbers = #tpu.dot_dimension_numbers<[1], [0], [0], [1], [0, 0, 1, 1], [], []>} : vector<16x16xbf16>, vector<16x64xbf16>, vector<16x64xf32> -> vector<16x64xf32>
      %c0_33 = arith.constant 0 : index
      %c0_34 = arith.constant 0 : index
      %42 = vector.load %arg6[%c0_33, %c0_34] : memref<32x16xbf16, #tpu.memory_space<vmem>>, vector<32x16xbf16>
      %43 = vector.extract_strided_slice %40 {offsets = [0, 0], sizes = [16, 16], strides = [1, 1]} : vector<16x64xf32> to vector<16x16xf32>
      %44 = vector.extract_strided_slice %41 {offsets = [0, 16], sizes = [16, 16], strides = [1, 1]} : vector<16x64xf32> to vector<16x16xf32>
      %45 = arith.addf %43, %44 : vector<16x16xf32>
      %46 = vector.extract_strided_slice %41 {offsets = [0, 0], sizes = [16, 16], strides = [1, 1]} : vector<16x64xf32> to vector<16x16xf32>
      %47 = vector.extract_strided_slice %40 {offsets = [0, 16], sizes = [16, 16], strides = [1, 1]} : vector<16x64xf32> to vector<16x16xf32>
      %48 = arith.subf %46, %47 : vector<16x16xf32>
      %49 = vector.extract_strided_slice %40 {offsets = [0, 32], sizes = [16, 16], strides = [1, 1]} : vector<16x64xf32> to vector<16x16xf32>
      %50 = vector.extract_strided_slice %41 {offsets = [0, 48], sizes = [16, 16], strides = [1, 1]} : vector<16x64xf32> to vector<16x16xf32>
      %51 = arith.addf %49, %50 : vector<16x16xf32>
      %52 = vector.extract_strided_slice %41 {offsets = [0, 32], sizes = [16, 16], strides = [1, 1]} : vector<16x64xf32> to vector<16x16xf32>
      %53 = vector.extract_strided_slice %40 {offsets = [0, 48], sizes = [16, 16], strides = [1, 1]} : vector<16x64xf32> to vector<16x16xf32>
      %54 = arith.subf %52, %53 : vector<16x16xf32>
      %55 = tpu.concatenate %45, %48 in 1 : vector<16x16xf32>, vector<16x16xf32> -> vector<16x32xf32>
      %56 = arith.truncf %55 : vector<16x32xf32> to vector<16x32xbf16>
      %cst_35 = arith.constant dense<0.000000e+00> : vector<16x16xf32>
      %57 = tpu.matmul %56, %42, %cst_35 {dimension_numbers = #tpu.dot_dimension_numbers<[1], [0], [0], [1], [0, 0, 1, 1], [], []>} : vector<16x32xbf16>, vector<32x16xbf16>, vector<16x16xf32> -> vector<16x16xf32>
      %c0_36 = arith.constant 0 : index
      %c0_37 = arith.constant 0 : index
      %c0_38 = arith.constant 0 : index
      %58 = vector.load %arg9[%c0_36, %c0_37, %c0_38] : memref<1x16x16xf32, #tpu.memory_space<vmem>>, vector<1x16x16xf32>
      %59 = vector.shape_cast %58 : vector<1x16x16xf32> to vector<16x16xf32>
      %60 = vector.shape_cast %57 : vector<16x16xf32> to vector<1x16x16xf32>
      tpu.vector_store %arg9[%c0_36, %c0_37, %c0_38], %60 {strides = array<i32>} : memref<1x16x16xf32, #tpu.memory_space<vmem>>, vector<1x16x16xf32>,
      %61 = tpu.concatenate %51, %54 in 1 : vector<16x16xf32>, vector<16x16xf32> -> vector<16x32xf32>
      %62 = arith.truncf %61 : vector<16x32xf32> to vector<16x32xbf16>
      %cst_39 = arith.constant dense<0.000000e+00> : vector<16x16xf32>
      %63 = tpu.matmul %62, %42, %cst_39 {dimension_numbers = #tpu.dot_dimension_numbers<[1], [0], [0], [1], [0, 0, 1, 1], [], []>} : vector<16x32xbf16>, vector<32x16xbf16>, vector<16x16xf32> -> vector<16x16xf32>
      %c0_40 = arith.constant 0 : index
      %c0_41 = arith.constant 0 : index
      %c0_42 = arith.constant 0 : index
      %64 = vector.load %arg10[%c0_40, %c0_41, %c0_42] : memref<1x16x16xf32, #tpu.memory_space<vmem>>, vector<1x16x16xf32>
      %65 = vector.shape_cast %64 : vector<1x16x16xf32> to vector<16x16xf32>
      %66 = vector.shape_cast %63 : vector<16x16xf32> to vector<1x16x16xf32>
      tpu.vector_store %arg10[%c0_40, %c0_41, %c0_42], %66 {strides = array<i32>} : memref<1x16x16xf32, #tpu.memory_space<vmem>>, vector<1x16x16xf32>,
    } else {
    }
    return
  }
  func.func @transform_0(%arg0: i32, %arg1: i32) -> (i32, i32, i32, i32) {
    %c0_i32 = arith.constant 0 : i32
    %c0_i32_0 = arith.constant 0 : i32
    %c0_i32_1 = arith.constant 0 : i32
    return %arg0, %arg1, %c0_i32, %c0_i32_0 : i32, i32, i32, i32
  }
  func.func @transform_1(%arg0: i32, %arg1: i32) -> (i32, i32) {
    %c0_i32 = arith.constant 0 : i32
    %c0_i32_0 = arith.constant 0 : i32
    %c0_i32_1 = arith.constant 0 : i32
    return %c0_i32, %c0_i32_0 : i32, i32
  }
  func.func @transform_2(%arg0: i32, %arg1: i32) -> (i32, i32) {
    %c0_i32 = arith.constant 0 : i32
    %c0_i32_0 = arith.constant 0 : i32
    %c0_i32_1 = arith.constant 0 : i32
    return %c0_i32, %c0_i32_0 : i32, i32
  }
  func.func @transform_3(%arg0: i32, %arg1: i32) -> (i32, i32) {
    %c0_i32 = arith.constant 0 : i32
    %c0_i32_0 = arith.constant 0 : i32
    %c0_i32_1 = arith.constant 0 : i32
    return %c0_i32, %c0_i32_0 : i32, i32
  }
  func.func @transform_4(%arg0: i32, %arg1: i32) -> (i32, i32) {
    %c0_i32 = arith.constant 0 : i32
    %c0_i32_0 = arith.constant 0 : i32
    %c0_i32_1 = arith.constant 0 : i32
    return %c0_i32, %c0_i32_0 : i32, i32
  }
  func.func @transform_5(%arg0: i32, %arg1: i32) -> (i32, i32, i32) {
    %c0_i32 = arith.constant 0 : i32
    %c0_i32_0 = arith.constant 0 : i32
    %c0_i32_1 = arith.constant 0 : i32
    return %arg1, %c0_i32, %c0_i32_0 : i32, i32, i32
  }
  func.func @transform_6(%arg0: i32, %arg1: i32) -> (i32, i32, i32) {
    %c0_i32 = arith.constant 0 : i32
    %c0_i32_0 = arith.constant 0 : i32
    %c0_i32_1 = arith.constant 0 : i32
    return %arg1, %c0_i32, %c0_i32_0 : i32, i32, i32
  }
  func.func @transform_7(%arg0: i32, %arg1: i32) -> (i32, i32, i32) {
    %c0_i32 = arith.constant 0 : i32
    %c0_i32_0 = arith.constant 0 : i32
    %c0_i32_1 = arith.constant 0 : i32
    return %arg0, %c0_i32, %c0_i32_0 : i32, i32, i32
  }
  func.func @transform_8(%arg0: i32, %arg1: i32) -> (i32, i32, i32) {
    %c0_i32 = arith.constant 0 : i32
    %c0_i32_0 = arith.constant 0 : i32
    %c0_i32_1 = arith.constant 0 : i32
    return %arg0, %c0_i32, %c0_i32_0 : i32, i32, i32
  }
}

module attributes {stable_mosaic.version = 11 : i64} {
  func.func @_ctf_kernel(%arg0: i32, %arg1: i32, %arg2: memref<1x1x16x16xbf16, #tpu.memory_space<vmem>>, %arg3: memref<16x16xbf16, #tpu.memory_space<vmem>>, %arg4: memref<16x16xbf16, #tpu.memory_space<vmem>>, %arg5: memref<16x32xbf16, #tpu.memory_space<vmem>>, %arg6: memref<32x16xbf16, #tpu.memory_space<vmem>>, %arg7: memref<1x16x32xbf16, #tpu.memory_space<vmem>>, %arg8: memref<1x16x32xbf16, #tpu.memory_space<vmem>>, %arg9: memref<1x16x16xf32, #tpu.memory_space<vmem>>, %arg10: memref<1x16x16xf32, #tpu.memory_space<vmem>>, %arg11: memref<16x32xf32, #tpu.memory_space<vmem>>, %arg12: memref<16x32xf32, #tpu.memory_space<vmem>>) attributes {dimension_semantics = [#tpu.dimension_semantics<parallel>, #tpu.dimension_semantics<arbitrary>], iteration_bounds = array<i64: 2, 2>, scalar_prefetch = 0 : i64, scratch_operands = 2 : i64, tpu.core_type = #tpu.core_type<tc>, window_params = [{transform_indices = @transform_0, window_bounds = array<i64: 1, 1, 16, 16>}, {pipeline_mode = #tpu.pipeline_mode<synchronous>, transform_indices = @transform_1, window_bounds = array<i64: 16, 16>}, {pipeline_mode = #tpu.pipeline_mode<synchronous>, transform_indices = @transform_2, window_bounds = array<i64: 16, 16>}, {pipeline_mode = #tpu.pipeline_mode<synchronous>, transform_indices = @transform_3, window_bounds = array<i64: 16, 32>}, {pipeline_mode = #tpu.pipeline_mode<synchronous>, transform_indices = @transform_4, window_bounds = array<i64: 32, 16>}, {transform_indices = @transform_5, window_bounds = array<i64: 1, 16, 32>}, {transform_indices = @transform_6, window_bounds = array<i64: 1, 16, 32>}, {transform_indices = @transform_7, window_bounds = array<i64: 1, 16, 16>}, {transform_indices = @transform_8, window_bounds = array<i64: 1, 16, 16>}]} {
    %c0 = arith.constant 0 : index
    %c0_0 = arith.constant 0 : index
    %0 = vector.load %arg3[%c0, %c0_0] : memref<16x16xbf16, #tpu.memory_space<vmem>>, vector<16x16xbf16>
    %c0_1 = arith.constant 0 : index
    %c0_2 = arith.constant 0 : index
    %1 = vector.load %arg4[%c0_1, %c0_2] : memref<16x16xbf16, #tpu.memory_space<vmem>>, vector<16x16xbf16>
    %c0_3 = arith.constant 0 : index
    %c0_4 = arith.constant 0 : index
    %c0_5 = arith.constant 0 : index
    %c0_6 = arith.constant 0 : index
    %2 = vector.load %arg2[%c0_3, %c0_4, %c0_5, %c0_6] : memref<1x1x16x16xbf16, #tpu.memory_space<vmem>>, vector<1x1x16x16xbf16>
    %3 = vector.shape_cast %2 : vector<1x1x16x16xbf16> to vector<16x16xbf16>
    %c0_7 = arith.constant 0 : index
    %c0_8 = arith.constant 0 : index
    %4 = vector.load %arg5[%c0_7, %c0_8] : memref<16x32xbf16, #tpu.memory_space<vmem>>, vector<16x32xbf16>
    %cst = arith.constant dense<0.000000e+00> : vector<16x32xf32>
    %5 = tpu.matmul %3, %4, %cst {dimension_numbers = #tpu.dot_dimension_numbers<[1], [0], [0], [1], [0, 0, 1, 1], [], []>} : vector<16x16xbf16>, vector<16x32xbf16>, vector<16x32xf32> -> vector<16x32xf32>
    %6 = arith.truncf %5 : vector<16x32xf32> to vector<16x32xbf16>
    %cst_9 = arith.constant dense<0.000000e+00> : vector<16x32xf32>
    %7 = tpu.matmul %0, %6, %cst_9 {dimension_numbers = #tpu.dot_dimension_numbers<[1], [0], [0], [1], [0, 0, 1, 1], [], []>} : vector<16x16xbf16>, vector<16x32xbf16>, vector<16x32xf32> -> vector<16x32xf32>
    %cst_10 = arith.constant dense<0.000000e+00> : vector<16x32xf32>
    %8 = tpu.matmul %1, %6, %cst_10 {dimension_numbers = #tpu.dot_dimension_numbers<[1], [0], [0], [1], [0, 0, 1, 1], [], []>} : vector<16x16xbf16>, vector<16x32xbf16>, vector<16x32xf32> -> vector<16x32xf32>
    %9 = vector.extract_strided_slice %7 {offsets = [0, 0], sizes = [16, 16], strides = [1, 1]} : vector<16x32xf32> to vector<16x16xf32>
    %10 = vector.extract_strided_slice %8 {offsets = [0, 16], sizes = [16, 16], strides = [1, 1]} : vector<16x32xf32> to vector<16x16xf32>
    %11 = arith.subf %9, %10 : vector<16x16xf32>
    %12 = vector.extract_strided_slice %8 {offsets = [0, 0], sizes = [16, 16], strides = [1, 1]} : vector<16x32xf32> to vector<16x16xf32>
    %13 = vector.extract_strided_slice %7 {offsets = [0, 16], sizes = [16, 16], strides = [1, 1]} : vector<16x32xf32> to vector<16x16xf32>
    %14 = arith.addf %12, %13 : vector<16x16xf32>
    %15 = tpu.concatenate %11, %14 in 1 : vector<16x16xf32>, vector<16x16xf32> -> vector<16x32xf32>
    %c0_i32 = arith.constant 0 : i32
    %16 = arith.cmpi eq, %arg1, %c0_i32 : i32
    %17 = arith.extui %16 : i1 to i32
    %c0_i32_11 = arith.constant 0 : i32
    %18 = arith.cmpi ne, %17, %c0_i32_11 : i32
    scf.if %18 {
      %cst_27 = arith.constant 0.000000e+00 : f32
      %36 = vector.broadcast %cst_27 : f32 to vector<16x32xf32>
      %c0_28 = arith.constant 0 : index
      %c0_29 = arith.constant 0 : index
      %37 = vector.load %arg11[%c0_28, %c0_29] : memref<16x32xf32, #tpu.memory_space<vmem>>, vector<16x32xf32>
      tpu.vector_store %arg11[%c0_28, %c0_29], %36 {strides = array<i32>} : memref<16x32xf32, #tpu.memory_space<vmem>>, vector<16x32xf32>,
      %cst_30 = arith.constant 0.000000e+00 : f32
      %38 = vector.broadcast %cst_30 : f32 to vector<16x32xf32>
      %c0_31 = arith.constant 0 : index
      %c0_32 = arith.constant 0 : index
      %39 = vector.load %arg12[%c0_31, %c0_32] : memref<16x32xf32, #tpu.memory_space<vmem>>, vector<16x32xf32>
      tpu.vector_store %arg12[%c0_31, %c0_32], %38 {strides = array<i32>} : memref<16x32xf32, #tpu.memory_space<vmem>>, vector<16x32xf32>,
    } else {
    }
    %c0_12 = arith.constant 0 : index
    %c0_13 = arith.constant 0 : index
    %19 = vector.load %arg11[%c0_12, %c0_13] : memref<16x32xf32, #tpu.memory_space<vmem>>, vector<16x32xf32>
    %c0_14 = arith.constant 0 : index
    %c0_15 = arith.constant 0 : index
    %c0_16 = arith.constant 0 : index
    %20 = vector.load %arg7[%c0_14, %c0_15, %c0_16] : memref<1x16x32xbf16, #tpu.memory_space<vmem>>, vector<1x16x32xbf16>
    %21 = vector.shape_cast %20 : vector<1x16x32xbf16> to vector<16x32xbf16>
    %22 = arith.extf %21 : vector<16x32xbf16> to vector<16x32xf32>
    %23 = arith.mulf %22, %15 : vector<16x32xf32>
    %24 = arith.addf %19, %23 : vector<16x32xf32>
    %c0_17 = arith.constant 0 : index
    %c0_18 = arith.constant 0 : index
    %25 = vector.load %arg11[%c0_17, %c0_18] : memref<16x32xf32, #tpu.memory_space<vmem>>, vector<16x32xf32>
    tpu.vector_store %arg11[%c0_17, %c0_18], %24 {strides = array<i32>} : memref<16x32xf32, #tpu.memory_space<vmem>>, vector<16x32xf32>,
    %c0_19 = arith.constant 0 : index
    %c0_20 = arith.constant 0 : index
    %26 = vector.load %arg12[%c0_19, %c0_20] : memref<16x32xf32, #tpu.memory_space<vmem>>, vector<16x32xf32>
    %c0_21 = arith.constant 0 : index
    %c0_22 = arith.constant 0 : index
    %c0_23 = arith.constant 0 : index
    %27 = vector.load %arg8[%c0_21, %c0_22, %c0_23] : memref<1x16x32xbf16, #tpu.memory_space<vmem>>, vector<1x16x32xbf16>
    %28 = vector.shape_cast %27 : vector<1x16x32xbf16> to vector<16x32xbf16>
    %29 = arith.extf %28 : vector<16x32xbf16> to vector<16x32xf32>
    %30 = arith.mulf %29, %15 : vector<16x32xf32>
    %31 = arith.addf %26, %30 : vector<16x32xf32>
    %c0_24 = arith.constant 0 : index
    %c0_25 = arith.constant 0 : index
    %32 = vector.load %arg12[%c0_24, %c0_25] : memref<16x32xf32, #tpu.memory_space<vmem>>, vector<16x32xf32>
    tpu.vector_store %arg12[%c0_24, %c0_25], %31 {strides = array<i32>} : memref<16x32xf32, #tpu.memory_space<vmem>>, vector<16x32xf32>,
    %c1_i32 = arith.constant 1 : i32
    %33 = arith.cmpi eq, %arg1, %c1_i32 : i32
    %34 = arith.extui %33 : i1 to i32
    %c0_i32_26 = arith.constant 0 : i32
    %35 = arith.cmpi ne, %34, %c0_i32_26 : i32
    scf.if %35 {
      %c0_27 = arith.constant 0 : index
      %c0_28 = arith.constant 0 : index
      %36 = vector.load %arg11[%c0_27, %c0_28] : memref<16x32xf32, #tpu.memory_space<vmem>>, vector<16x32xf32>
      %c0_29 = arith.constant 0 : index
      %c0_30 = arith.constant 0 : index
      %37 = vector.load %arg12[%c0_29, %c0_30] : memref<16x32xf32, #tpu.memory_space<vmem>>, vector<16x32xf32>
      %38 = tpu.concatenate %36, %37 in 1 : vector<16x32xf32>, vector<16x32xf32> -> vector<16x64xf32>
      %39 = arith.truncf %38 : vector<16x64xf32> to vector<16x64xbf16>
      %cst_31 = arith.constant dense<0.000000e+00> : vector<16x64xf32>
      %40 = tpu.matmul %0, %39, %cst_31 {dimension_numbers = #tpu.dot_dimension_numbers<[1], [0], [0], [1], [0, 0, 1, 1], [], []>} : vector<16x16xbf16>, vector<16x64xbf16>, vector<16x64xf32> -> vector<16x64xf32>
      %cst_32 = arith.constant dense<0.000000e+00> : vector<16x64xf32>
      %41 = tpu.matmul %1, %39, %cst_32 {dimension_numbers = #tpu.dot_dimension_numbers<[1], [0], [0], [1], [0, 0, 1, 1], [], []>} : vector<16x16xbf16>, vector<16x64xbf16>, vector<16x64xf32> -> vector<16x64xf32>
      %c0_33 = arith.constant 0 : index
      %c0_34 = arith.constant 0 : index
      %42 = vector.load %arg6[%c0_33, %c0_34] : memref<32x16xbf16, #tpu.memory_space<vmem>>, vector<32x16xbf16>
      %43 = vector.extract_strided_slice %40 {offsets = [0, 0], sizes = [16, 16], strides = [1, 1]} : vector<16x64xf32> to vector<16x16xf32>
      %44 = vector.extract_strided_slice %41 {offsets = [0, 16], sizes = [16, 16], strides = [1, 1]} : vector<16x64xf32> to vector<16x16xf32>
      %45 = arith.addf %43, %44 : vector<16x16xf32>
      %46 = vector.extract_strided_slice %41 {offsets = [0, 0], sizes = [16, 16], strides = [1, 1]} : vector<16x64xf32> to vector<16x16xf32>
      %47 = vector.extract_strided_slice %40 {offsets = [0, 16], sizes = [16, 16], strides = [1, 1]} : vector<16x64xf32> to vector<16x16xf32>
      %48 = arith.subf %46, %47 : vector<16x16xf32>
      %49 = vector.extract_strided_slice %40 {offsets = [0, 32], sizes = [16, 16], strides = [1, 1]} : vector<16x64xf32> to vector<16x16xf32>
      %50 = vector.extract_strided_slice %41 {offsets = [0, 48], sizes = [16, 16], strides = [1, 1]} : vector<16x64xf32> to vector<16x16xf32>
      %51 = arith.addf %49, %50 : vector<16x16xf32>
      %52 = vector.extract_strided_slice %41 {offsets = [0, 32], sizes = [16, 16], strides = [1, 1]} : vector<16x64xf32> to vector<16x16xf32>
      %53 = vector.extract_strided_slice %40 {offsets = [0, 48], sizes = [16, 16], strides = [1, 1]} : vector<16x64xf32> to vector<16x16xf32>
      %54 = arith.subf %52, %53 : vector<16x16xf32>
      %55 = tpu.concatenate %45, %48 in 1 : vector<16x16xf32>, vector<16x16xf32> -> vector<16x32xf32>
      %56 = arith.truncf %55 : vector<16x32xf32> to vector<16x32xbf16>
      %cst_35 = arith.constant dense<0.000000e+00> : vector<16x16xf32>
      %57 = tpu.matmul %56, %42, %cst_35 {dimension_numbers = #tpu.dot_dimension_numbers<[1], [0], [0], [1], [0, 0, 1, 1], [], []>} : vector<16x32xbf16>, vector<32x16xbf16>, vector<16x16xf32> -> vector<16x16xf32>
      %c0_36 = arith.constant 0 : index
      %c0_37 = arith.constant 0 : index
      %c0_38 = arith.constant 0 : index
      %58 = vector.load %arg9[%c0_36, %c0_37, %c0_38] : memref<1x16x16xf32, #tpu.memory_space<vmem>>, vector<1x16x16xf32>
      %59 = vector.shape_cast %58 : vector<1x16x16xf32> to vector<16x16xf32>
      %60 = vector.shape_cast %57 : vector<16x16xf32> to vector<1x16x16xf32>
      tpu.vector_store %arg9[%c0_36, %c0_37, %c0_38], %60 {strides = array<i32>} : memref<1x16x16xf32, #tpu.memory_space<vmem>>, vector<1x16x16xf32>,
      %61 = tpu.concatenate %51, %54 in 1 : vector<16x16xf32>, vector<16x16xf32> -> vector<16x32xf32>
      %62 = arith.truncf %61 : vector<16x32xf32> to vector<16x32xbf16>
      %cst_39 = arith.constant dense<0.000000e+00> : vector<16x16xf32>
      %63 = tpu.matmul %62, %42, %cst_39 {dimension_numbers = #tpu.dot_dimension_numbers<[1], [0], [0], [1], [0, 0, 1, 1], [], []>} : vector<16x32xbf16>, vector<32x16xbf16>, vector<16x16xf32> -> vector<16x16xf32>
      %c0_40 = arith.constant 0 : index
      %c0_41 = arith.constant 0 : index
      %c0_42 = arith.constant 0 : index
      %64 = vector.load %arg10[%c0_40, %c0_41, %c0_42] : memref<1x16x16xf32, #tpu.memory_space<vmem>>, vector<1x16x16xf32>
      %65 = vector.shape_cast %64 : vector<1x16x16xf32> to vector<16x16xf32>
      %66 = vector.shape_cast %63 : vector<16x16xf32> to vector<1x16x16xf32>
      tpu.vector_store %arg10[%c0_40, %c0_41, %c0_42], %66 {strides = array<i32>} : memref<1x16x16xf32, #tpu.memory_space<vmem>>, vector<1x16x16xf32>,
    } else {
    }
    return
  }
  func.func @transform_0(%arg0: i32, %arg1: i32) -> (i32, i32, i32, i32) {
    %c0_i32 = arith.constant 0 : i32
    %c0_i32_0 = arith.constant 0 : i32
    %c0_i32_1 = arith.constant 0 : i32
    return %arg0, %arg1, %c0_i32, %c0_i32_0 : i32, i32, i32, i32
  }
  func.func @transform_1(%arg0: i32, %arg1: i32) -> (i32, i32) {
    %c0_i32 = arith.constant 0 : i32
    %c0_i32_0 = arith.constant 0 : i32
    %c0_i32_1 = arith.constant 0 : i32
    return %c0_i32, %c0_i32_0 : i32, i32
  }
  func.func @transform_2(%arg0: i32, %arg1: i32) -> (i32, i32) {
    %c0_i32 = arith.constant 0 : i32
    %c0_i32_0 = arith.constant 0 : i32
    %c0_i32_1 = arith.constant 0 : i32
    return %c0_i32, %c0_i32_0 : i32, i32
  }
  func.func @transform_3(%arg0: i32, %arg1: i32) -> (i32, i32) {
    %c0_i32 = arith.constant 0 : i32
    %c0_i32_0 = arith.constant 0 : i32
    %c0_i32_1 = arith.constant 0 : i32
    return %c0_i32, %c0_i32_0 : i32, i32
  }
  func.func @transform_4(%arg0: i32, %arg1: i32) -> (i32, i32) {
    %c0_i32 = arith.constant 0 : i32
    %c0_i32_0 = arith.constant 0 : i32
    %c0_i32_1 = arith.constant 0 : i32
    return %c0_i32, %c0_i32_0 : i32, i32
  }
  func.func @transform_5(%arg0: i32, %arg1: i32) -> (i32, i32, i32) {
    %c0_i32 = arith.constant 0 : i32
    %c0_i32_0 = arith.constant 0 : i32
    %c0_i32_1 = arith.constant 0 : i32
    return %arg1, %c0_i32, %c0_i32_0 : i32, i32, i32
  }
  func.func @transform_6(%arg0: i32, %arg1: i32) -> (i32, i32, i32) {
    %c0_i32 = arith.constant 0 : i32
    %c0_i32_0 = arith.constant 0 : i32
    %c0_i32_1 = arith.constant 0 : i32
    return %arg1, %c0_i32, %c0_i32_0 : i32, i32, i32
  }
  func.func @transform_7(%arg0: i32, %arg1: i32) -> (i32, i32, i32) {
    %c0_i32 = arith.constant 0 : i32
    %c0_i32_0 = arith.constant 0 : i32
    %c0_i32_1 = arith.constant 0 : i32
    return %arg0, %c0_i32, %c0_i32_0 : i32, i32, i32
  }
  func.func @transform_8(%arg0: i32, %arg1: i32) -> (i32, i32, i32) {
    %c0_i32 = arith.constant 0 : i32
    %c0_i32_0 = arith.constant 0 : i32
    %c0_i32_1 = arith.constant 0 : i32
    return %arg0, %c0_i32, %c0_i32_0 : i32, i32, i32
  }
}

</mosaic_0001>

<llo_original>
// kernel: tpu_custom_call.1
$region0: #{tpu_custom_call.1}
  #allocation0 [shape = 'u32[]', space=smem, size = 0x4, offset = 0x4, fixed_abs, tag = 'smem constant byte address 0x4 - core index']
  #allocation1 [shape = 'u32[144,128]{1,0:T(1,128)}', space=vmem, size = 0x12000, scoped, tag = 'internal scratch']
  #allocation2 [shape = 'f32[16,32]{1,0:T(8,128)}', space=vmem, size = 0x2000, scoped, tag = 'scratch operand']
  #allocation3 [shape = 'f32[16,32]{1,0:T(8,128)}', space=vmem, size = 0x2000, scoped, tag = 'scratch operand']
  %s0 = inlined_call_operand.hbm [shape: bf16[2,2,16,16], index: 0, kind: input, shape index: {}]
  %s1 = inlined_call_operand.hbm [shape: bf16[16,16], index: 1, kind: input, shape index: {}]
  %s2 = inlined_call_operand.hbm [shape: bf16[16,16], index: 2, kind: input, shape index: {}]
  %s3 = inlined_call_operand.hbm [shape: bf16[16,32], index: 3, kind: input, shape index: {}]
  %s4 = inlined_call_operand.vmem [shape: bf16[32,16], index: 4, kind: input, shape index: {}]
  %s5 = inlined_call_operand.vmem [shape: bf16[2,16,32], index: 5, kind: input, shape index: {}]
  %s6 = inlined_call_operand.vmem [shape: bf16[2,16,32], index: 6, kind: input, shape index: {}]
  %s7 = inlined_call_operand.hbm [shape: f32[2,16,16], index: 7, kind: output, shape index: {0}]
  %s8 = inlined_call_operand.hbm [shape: f32[2,16,16], index: 8, kind: output, shape index: {1}]
  %9 = xla_tuple %s7, %s8
  %s10 = sld [smem:[#allocation0]]
  $region93: #{tpu_custom_call.1} parent=0
    _
  %s12 = ssub.s32 1, %s10
  %s13 = scalar_select 0, %s12, %s10
  $region1: #{tpu_custom_call.1} parent=0
    #allocation4 [shape = 'u8[8192]{0}', space=vmem, size = 0x2000, scoped, tag = 'input window, operand 0']
    #allocation5 [shape = 's32[2]{0}', space=sflag, size = 0x8, scoped, tag = 'scoped memory for tpu_custom_call.1']
    #allocation6 [shape = 's32[2]{0}', space=sflag, size = 0x8, scoped, tag = 'scoped memory for tpu_custom_call.1']
    #allocation7 [shape = 'u8[4096]{0}', space=vmem, size = 0x1000, scoped, tag = 'input window, operand 1, single buffered']
    #allocation8 [shape = 's32[1]{0}', space=sflag, size = 0x4, scoped, tag = 'scoped memory for tpu_custom_call.1']
    #allocation9 [shape = 'u8[4096]{0}', space=vmem, size = 0x1000, scoped, tag = 'input window, operand 2, single buffered']
    #allocation10 [shape = 'u8[4096]{0}', space=vmem, size = 0x1000, scoped, tag = 'input window, operand 3, single buffered']
    #allocation11 [shape = 's32[1]{0}', space=sflag, size = 0x4, scoped, tag = 'scoped memory for tpu_custom_call.1']
    #allocation12 [shape = 'u8[16384]{0}', space=vmem, size = 0x4000, scoped, tag = 'output window, operand 0']
    #allocation13 [shape = 'u8[16384]{0}', space=vmem, size = 0x4000, scoped, tag = 'output window, operand 1']
    #allocation14 [shape = 's32[2]{0}', space=sflag, size = 0x8, scoped, tag = 'scoped memory for tpu_custom_call.1']
    %14 = vsyncpa [#allocation5], 0
    %s15 = scalar_lea.sflag [#allocation5], 1
    %16 = vsyncpa %s15, 0
    %17 = vsyncpa [#allocation8], 0
    %18 = vsyncpa [#allocation11], 0
    %19 = vsyncpa [#allocation6], 0
    %s20 = scalar_lea.sflag [#allocation6], 1
    %21 = vsyncpa %s20, 0
    %22 = vsyncpa [#allocation14], 0
    %s23 = scalar_lea.sflag [#allocation14], 1
    %24 = vsyncpa %s23, 0
    loop: start=0, step=1, limit=6
    $region2: #{tpu_custom_call.1} parent=1 // loop_pre_header
      _
    $region3: #{tpu_custom_call.1} parent=1 // loop_header
      %s26 = sphi 0, %s30
      %p27 = scmp.ge.s32.totalorder %s26, 6
      %s33 = sphi 0, %s45
      %s34 = sphi 0, %s41
      %s35 = sphi 0, %s33
      %s36 = sphi 0, %s34
      %s37 = sphi 0, %s35
      %s38 = sphi 0, %s36
      %s50 = sphi 0, %s52
      %s53 = sphi 0, %s50
      %s54 = sphi 0, %s53
      %s70 = sphi 0, %s54
      %s74 = sphi 0, %s74
      %s76 = sphi 0, %s74
      %s77 = sphi 0, %s76
      %s91 = sphi 0, %s77
      %s95 = sphi 0, %s95
      %s97 = sphi 0, %s95
      %s98 = sphi 0, %s97
      %s112 = sphi 0, %s98
      %s116 = sphi 0, %s116
      %s118 = sphi 0, %s116
      %s119 = sphi 0, %s118
      %s133 = sphi 0, %s119
      %s137 = sphi 0, %s137
      %s139 = sphi 0, %s137
      %s140 = sphi 0, %s139
      %s154 = sphi 0, %s140
      %s160 = sphi 0, %s162
      %s163 = sphi 0, %s160
      %s164 = sphi 0, %s163
      %s180 = sphi 0, %s164
      %s186 = sphi 0, %s188
      %s189 = sphi 0, %s186
      %s190 = sphi 0, %s189
      %s206 = sphi 0, %s190
      %s212 = sphi 0, %s214
      %s215 = sphi 0, %s212
      %s216 = sphi 0, %s215
      %s232 = sphi 0, %s216
      %s238 = sphi 0, %s240
      %s241 = sphi 0, %s238
      %s242 = sphi 0, %s241
      %s258 = sphi 0, %s242
    $region4: #{tpu_custom_call.1} parent=1 // loop_header_branch
      %29 = sbr.rel (%p27) target = $region8
    $region5: #{tpu_custom_call.1} parent=1 // loop_body
      %s31 = ssub.s32 %s26, 1
      %s32 = ssub.s32 %s26, 2
      %s39 = sadd.s32 1, %s34
      %p40 = scmp.ge.s32.totalorder %s39, 2
      %s41 = scalar_select %p40, 0, %s39
      %s42 = sadd.s32 1, %s33
      %s43 = scalar_select %p40, %s42, %s33
      %p44 = scmp.ge.s32.totalorder %s43, 2
      %s45 = scalar_select %p44, 0, %s43
      %s46 = ssub.s32 %s33, %s45
      %s47 = ssub.s32 %s34, %s41
      %s48 = sor.u32 %s46, %s47
      %p49 = scmp.eq.s32.totalorder %s48, 0
      %s51 = sadd.s32 %s50, 1
      %s52 = scalar_select %p49, %s50, %s51
      %p55 = pneg %p49
      %p56 = scmp.eq.s32.totalorder %s26, 3
      %p57 = por %p55, %p56
      %p58 = scmp.ne.s32.totalorder %s50, %s53
      %p59 = scmp.eq.s32.totalorder %s26, 0
      %p60 = por %p58, %p59
      %p61 = scmp.ne.s32.totalorder %s50, %s53
      %p62 = scmp.eq.s32.totalorder %s31, 3
      %p63 = por %p61, %p62
      %p64 = scmp.ne.s32.totalorder %s53, %s54
      %p65 = scmp.eq.s32.totalorder %s31, 0
      %p66 = por %p64, %p65
      %p67 = scmp.ne.s32.totalorder %s53, %s54
      %p68 = scmp.eq.s32.totalorder %s32, 3
      %p69 = por %p67, %p68
      %p71 = scmp.ne.s32.totalorder %s54, %s70
      %p72 = scmp.eq.s32.totalorder %s32, 0
      %p73 = por %p71, %p72
      %s75 = sadd.s32 %s74, 1
      %p78 = scmp.eq.s32.totalorder %s26, 3
      %p79 = scmp.ne.s32.totalorder %s74, %s76
      %p80 = scmp.eq.s32.totalorder %s26, 0
      %p81 = por %p79, %p80
      %p82 = scmp.ne.s32.totalorder %s74, %s76
      %p83 = scmp.eq.s32.totalorder %s31, 3
      %p84 = por %p82, %p83
      %p85 = scmp.ne.s32.totalorder %s76, %s77
      %p86 = scmp.eq.s32.totalorder %s31, 0
      %p87 = por %p85, %p86
      %p88 = scmp.ne.s32.totalorder %s76, %s77
      %p89 = scmp.eq.s32.totalorder %s32, 3
      %p90 = por %p88, %p89
      %p92 = scmp.ne.s32.totalorder %s77, %s91
      %p93 = scmp.eq.s32.totalorder %s32, 0
      %p94 = por %p92, %p93
      %s96 = sadd.s32 %s95, 1
      %p99 = scmp.eq.s32.totalorder %s26, 3
      %p100 = scmp.ne.s32.totalorder %s95, %s97
      %p101 = scmp.eq.s32.totalorder %s26, 0
      %p102 = por %p100, %p101
      %p103 = scmp.ne.s32.totalorder %s95, %s97
      %p104 = scmp.eq.s32.totalorder %s31, 3
      %p105 = por %p103, %p104
      %p106 = scmp.ne.s32.totalorder %s97, %s98
      %p107 = scmp.eq.s32.totalorder %s31, 0
      %p108 = por %p106, %p107
      %p109 = scmp.ne.s32.totalorder %s97, %s98
      %p110 = scmp.eq.s32.totalorder %s32, 3
      %p111 = por %p109, %p110
      %p113 = scmp.ne.s32.totalorder %s98, %s112
      %p114 = scmp.eq.s32.totalorder %s32, 0
      %p115 = por %p113, %p114
      %s117 = sadd.s32 %s116, 1
      %p120 = scmp.eq.s32.totalorder %s26, 3
      %p121 = scmp.ne.s32.totalorder %s116, %s118
      %p122 = scmp.eq.s32.totalorder %s26, 0
      %p123 = por %p121, %p122
      %p124 = scmp.ne.s32.totalorder %s116, %s118
      %p125 = scmp.eq.s32.totalorder %s31, 3
      %p126 = por %p124, %p125
      %p127 = scmp.ne.s32.totalorder %s118, %s119
      %p128 = scmp.eq.s32.totalorder %s31, 0
      %p129 = por %p127, %p128
      %p130 = scmp.ne.s32.totalorder %s118, %s119
      %p131 = scmp.eq.s32.totalorder %s32, 3
      %p132 = por %p130, %p131
      %p134 = scmp.ne.s32.totalorder %s119, %s133
      %p135 = scmp.eq.s32.totalorder %s32, 0
      %p136 = por %p134, %p135
      %s138 = sadd.s32 %s137, 1
      %p141 = scmp.eq.s32.totalorder %s26, 3
      %p142 = scmp.ne.s32.totalorder %s137, %s139
      %p143 = scmp.eq.s32.totalorder %s26, 0
      %p144 = por %p142, %p143
      %p145 = scmp.ne.s32.totalorder %s137, %s139
      %p146 = scmp.eq.s32.totalorder %s31, 3
      %p147 = por %p145, %p146
      %p148 = scmp.ne.s32.totalorder %s139, %s140
      %p149 = scmp.eq.s32.totalorder %s31, 0
      %p150 = por %p148, %p149
      %p151 = scmp.ne.s32.totalorder %s139, %s140
      %p152 = scmp.eq.s32.totalorder %s32, 3
      %p153 = por %p151, %p152
      %p155 = scmp.ne.s32.totalorder %s140, %s154
      %p156 = scmp.eq.s32.totalorder %s32, 0
      %p157 = por %p155, %p156
      %s158 = ssub.s32 %s34, %s41
      %p159 = scmp.eq.s32.totalorder %s158, 0
      %s161 = sadd.s32 %s160, 1
      %s162 = scalar_select %p159, %s160, %s161
      %p165 = pneg %p159
      %p166 = scmp.eq.s32.totalorder %s26, 3
      %p167 = por %p165, %p166
      %p168 = scmp.ne.s32.totalorder %s160, %s163
      %p169 = scmp.eq.s32.totalorder %s26, 0
      %p170 = por %p168, %p169
      %p171 = scmp.ne.s32.totalorder %s160, %s163
      %p172 = scmp.eq.s32.totalorder %s31, 3
      %p173 = por %p171, %p172
      %p174 = scmp.ne.s32.totalorder %s163, %s164
      %p175 = scmp.eq.s32.totalorder %s31, 0
      %p176 = por %p174, %p175
      %p177 = scmp.ne.s32.totalorder %s163, %s164
      %p178 = scmp.eq.s32.totalorder %s32, 3
      %p179 = por %p177, %p178
      %p181 = scmp.ne.s32.totalorder %s164, %s180
      %p182 = scmp.eq.s32.totalorder %s32, 0
      %p183 = por %p181, %p182
      %s184 = ssub.s32 %s34, %s41
      %p185 = scmp.eq.s32.totalorder %s184, 0
      %s187 = sadd.s32 %s186, 1
      %s188 = scalar_select %p185, %s186, %s187
      %p191 = pneg %p185
      %p192 = scmp.eq.s32.totalorder %s26, 3
      %p193 = por %p191, %p192
      %p194 = scmp.ne.s32.totalorder %s186, %s189
      %p195 = scmp.eq.s32.totalorder %s26, 0
      %p196 = por %p194, %p195
      %p197 = scmp.ne.s32.totalorder %s186, %s189
      %p198 = scmp.eq.s32.totalorder %s31, 3
      %p199 = por %p197, %p198
      %p200 = scmp.ne.s32.totalorder %s189, %s190
      %p201 = scmp.eq.s32.totalorder %s31, 0
      %p202 = por %p200, %p201
      %p203 = scmp.ne.s32.totalorder %s189, %s190
      %p204 = scmp.eq.s32.totalorder %s32, 3
      %p205 = por %p203, %p204
      %p207 = scmp.ne.s32.totalorder %s190, %s206
      %p208 = scmp.eq.s32.totalorder %s32, 0
      %p209 = por %p207, %p208
      %s210 = ssub.s32 %s33, %s45
      %p211 = scmp.eq.s32.totalorder %s210, 0
      %s213 = sadd.s32 %s212, 1
      %s214 = scalar_select %p211, %s212, %s213
      %p217 = pneg %p211
      %p218 = scmp.eq.s32.totalorder %s26, 3
      %p219 = por %p217, %p218
      %p220 = scmp.ne.s32.totalorder %s212, %s215
      %p221 = scmp.eq.s32.totalorder %s26, 0
      %p222 = por %p220, %p221
      %p223 = scmp.ne.s32.totalorder %s212, %s215
      %p224 = scmp.eq.s32.totalorder %s31, 3
      %p225 = por %p223, %p224
      %p226 = scmp.ne.s32.totalorder %s215, %s216
      %p227 = scmp.eq.s32.totalorder %s31, 0
      %p228 = por %p226, %p227
      %p229 = scmp.ne.s32.totalorder %s215, %s216
      %p230 = scmp.eq.s32.totalorder %s32, 3
      %p231 = por %p229, %p230
      %p233 = scmp.ne.s32.totalorder %s216, %s232
      %p234 = scmp.eq.s32.totalorder %s32, 0
      %p235 = por %p233, %p234
      %s236 = ssub.s32 %s33, %s45
      %p237 = scmp.eq.s32.totalorder %s236, 0
      %s239 = sadd.s32 %s238, 1
      %s240 = scalar_select %p237, %s238, %s239
      %p243 = pneg %p237
      %p244 = scmp.eq.s32.totalorder %s26, 3
      %p245 = por %p243, %p244
      %p246 = scmp.ne.s32.totalorder %s238, %s241
      %p247 = scmp.eq.s32.totalorder %s26, 0
      %p248 = por %p246, %p247
      %p249 = scmp.ne.s32.totalorder %s238, %s241
      %p250 = scmp.eq.s32.totalorder %s31, 3
      %p251 = por %p249, %p250
      %p252 = scmp.ne.s32.totalorder %s241, %s242
      %p253 = scmp.eq.s32.totalorder %s31, 0
      %p254 = por %p252, %p253
      %p255 = scmp.ne.s32.totalorder %s241, %s242
      %p256 = scmp.eq.s32.totalorder %s32, 3
      %p257 = por %p255, %p256
      %p259 = scmp.ne.s32.totalorder %s242, %s258
      %p260 = scmp.eq.s32.totalorder %s32, 0
      %p261 = por %p259, %p260
      %p262 = scmp.le.s32.totalorder 1, %s26
      %p263 = scmp.lt.s32.totalorder %s26, 5
      %p264 = pnand %p262, %p263
      %p265 = pneg %p264
      // Predicated region
      $region9: #{tpu_custom_call.1} parent=5 // pred_check
        _
      $region10: #{tpu_custom_call.1} parent=5 // pred_check_branch
        %267 = sbr.rel (%p264) target = $region12
      $region11: #{tpu_custom_call.1} parent=5 // pred_region
        %s268 = ssub.s32 %s26, 1
        // Predicated region
        $region13: #{tpu_custom_call.1} parent=11 // pred_check
          %p269 = pneg %p87
        $region14: #{tpu_custom_call.1} parent=11 // pred_check_branch
          %271 = sbr.rel (%p269) target = $region16
        $region15: #{tpu_custom_call.1} parent=11 // pred_region
          %s273 = ssub.s32 128, 128
          %274 = vsyncadd [#allocation8], %s273
          %s275 = sshll.u32 [#allocation7], 4
          %s276 = int_to_ptr.vmem [resolvable:$true] %s275
          %281 = dma.hbm_to_vmem [thread:$0]  %s1, 128, %s276, [#allocation8], 64, 64, 4
        $region16: #{tpu_custom_call.1} parent=11 // pred_fallthru
          _
        // Predicated region
        $region17: #{tpu_custom_call.1} parent=11 // pred_check
          %p282 = pneg %p108
        $region18: #{tpu_custom_call.1} parent=11 // pred_check_branch
          %284 = sbr.rel (%p282) target = $region20
        $region19: #{tpu_custom_call.1} parent=11 // pred_region
          %s286 = ssub.s32 128, 128
          %287 = vsyncadd [#allocation8], %s286
          %s288 = sshll.u32 [#allocation9], 4
          %s289 = int_to_ptr.vmem [resolvable:$true] %s288
          %294 = dma.hbm_to_vmem [thread:$0]  %s2, 128, %s289, [#allocation8], 64, 64, 4
        $region20: #{tpu_custom_call.1} parent=11 // pred_fallthru
          _
        // Predicated region
        $region21: #{tpu_custom_call.1} parent=11 // pred_check
          %p295 = pneg %p129
        $region22: #{tpu_custom_call.1} parent=11 // pred_check_branch
          %297 = sbr.rel (%p295) target = $region24
        $region23: #{tpu_custom_call.1} parent=11 // pred_region
          %s299 = ssub.s32 128, 128
          %300 = vsyncadd [#allocation11], %s299
          %s301 = sshll.u32 [#allocation10], 4
          %s302 = int_to_ptr.vmem [resolvable:$true] %s301
          %307 = dma.hbm_to_vmem [thread:$0]  %s3, 128, %s302, [#allocation11], 64, 64, 4
        $region24: #{tpu_custom_call.1} parent=11 // pred_fallthru
          _
        // Predicated region
        $region25: #{tpu_custom_call.1} parent=11 // pred_check
          %p308 = pneg %p150
        $region26: #{tpu_custom_call.1} parent=11 // pred_check_branch
          %310 = sbr.rel (%p308) target = $region28
        $region27: #{tpu_custom_call.1} parent=11 // pred_region
          _
        $region28: #{tpu_custom_call.1} parent=11 // pred_fallthru
          _
      $region12: #{tpu_custom_call.1} parent=5 // pred_fallthru
        _
      %p311 = scmp.lt.s32.totalorder %s26, 4
      // Predicated region
      $region29: #{tpu_custom_call.1} parent=5 // pred_check
        %p312 = pneg %p311
      $region30: #{tpu_custom_call.1} parent=5 // pred_check_branch
        %314 = sbr.rel (%p312) target = $region32
      $region31: #{tpu_custom_call.1} parent=5 // pred_region
        // Predicated region
        $region33: #{tpu_custom_call.1} parent=31 // pred_check
          %p315 = pneg %p60
        $region34: #{tpu_custom_call.1} parent=31 // pred_check_branch
          %317 = sbr.rel (%p315) target = $region36
        $region35: #{tpu_custom_call.1} parent=31 // pred_region
          %s318 = sand.u32 %s50, 1
          %s319 = scalar_lea.sflag [#allocation5], %s318
          %s320 = sand.u32 %s50, 1
          %s321 = smul.addr %s320, 8
          %s322 = scalar_lea.vmem [#allocation4], %s321
          %s324 = ssub.s32 128, 128
          %325 = vsyncadd %s319, %s324
          %s326 = smul.addr %s34, 2
          %s327 = smul.addr %s33, 4
          %s328 = sadd.s32 %s326, %s327
          %s329 = smul.addr %s328, 64
          %s330 = scalar_lea.hbm %s0, %s329
          %s331 = sshll.u32 %s322, 4
          %s332 = int_to_ptr.vmem [resolvable:$true] %s331
          %337 = dma.hbm_to_vmem [thread:$0]  %s330, 128, %s332, %s319, 64, 64, 4
        $region36: #{tpu_custom_call.1} parent=31 // pred_fallthru
          _
        // Predicated region
        $region37: #{tpu_custom_call.1} parent=31 // pred_check
          %p338 = pneg %p170
        $region38: #{tpu_custom_call.1} parent=31 // pred_check_branch
          %340 = sbr.rel (%p338) target = $region40
        $region39: #{tpu_custom_call.1} parent=31 // pred_region
          %p341 = scmp.lt.s32.totalorder %s34, 1
          %s342 = scalar_select %p341, %s34, 1
          %s343 = smul.addr %s342, 2
          %s344 = smul.addr %s343, 4
          %s345 = scalar_lea.vmem %s5, %s344
        $region40: #{tpu_custom_call.1} parent=31 // pred_fallthru
          _
        // Predicated region
        $region41: #{tpu_custom_call.1} parent=31 // pred_check
          %p346 = pneg %p196
        $region42: #{tpu_custom_call.1} parent=31 // pred_check_branch
          %348 = sbr.rel (%p346) target = $region44
        $region43: #{tpu_custom_call.1} parent=31 // pred_region
          %p349 = scmp.lt.s32.totalorder %s34, 1
          %s350 = scalar_select %p349, %s34, 1
          %s351 = smul.addr %s350, 2
          %s352 = smul.addr %s351, 4
          %s353 = scalar_lea.vmem %s6, %s352
        $region44: #{tpu_custom_call.1} parent=31 // pred_fallthru
          _
      $region32: #{tpu_custom_call.1} parent=5 // pred_fallthru
        _
      %p354 = scmp.le.s32.totalorder 1, %s26
      %p355 = scmp.lt.s32.totalorder %s26, 5
      %p356 = pnand %p354, %p355
      %p357 = pneg %p356
      // Predicated region
      $region45: #{tpu_custom_call.1} parent=5 // pred_check
        _
      $region46: #{tpu_custom_call.1} parent=5 // pred_check_branch
        %359 = sbr.rel (%p356) target = $region48
      $region47: #{tpu_custom_call.1} parent=5 // pred_region
        %s360 = ssub.s32 %s26, 1
        %s361 = sand.u32 %s53, 1
        %s362 = scalar_lea.sflag [#allocation5], %s361
        %s363 = sand.u32 %s53, 1
        %s364 = smul.addr %s363, 8
        %s365 = scalar_lea.vmem [#allocation4], %s364
        // Predicated region
        $region49: #{tpu_custom_call.1} parent=47 // pred_check
          %p366 = pneg %p66
        $region50: #{tpu_custom_call.1} parent=47 // pred_check_branch
          %368 = sbr.rel (%p366) target = $region52
        $region51: #{tpu_custom_call.1} parent=47 // pred_region
          %369 = dma.done %s362, 128
        $region52: #{tpu_custom_call.1} parent=47 // pred_fallthru
          _
        // Predicated region
        $region53: #{tpu_custom_call.1} parent=47 // pred_check
          %p370 = pneg %p87
        $region54: #{tpu_custom_call.1} parent=47 // pred_check_branch
          %372 = sbr.rel (%p370) target = $region56
        $region55: #{tpu_custom_call.1} parent=47 // pred_region
          %373 = dma.done [#allocation8], 128
        $region56: #{tpu_custom_call.1} parent=47 // pred_fallthru
          _
        // Predicated region
        $region57: #{tpu_custom_call.1} parent=47 // pred_check
          %p374 = pneg %p108
        $region58: #{tpu_custom_call.1} parent=47 // pred_check_branch
          %376 = sbr.rel (%p374) target = $region60
        $region59: #{tpu_custom_call.1} parent=47 // pred_region
          %377 = dma.done [#allocation8], 128
        $region60: #{tpu_custom_call.1} parent=47 // pred_fallthru
          _
        // Predicated region
        $region61: #{tpu_custom_call.1} parent=47 // pred_check
          %p378 = pneg %p129
        $region62: #{tpu_custom_call.1} parent=47 // pred_check_branch
          %380 = sbr.rel (%p378) target = $region64
        $region63: #{tpu_custom_call.1} parent=47 // pred_region
          %381 = dma.done [#allocation11], 128
        $region64: #{tpu_custom_call.1} parent=47 // pred_fallthru
          _
        %s382 = sand.u32 %s53, 1
        %s383 = scalar_lea.sflag [#allocation5], %s382
        %s384 = sand.u32 %s53, 1
        %s385 = smul.addr %s384, 8
        %s386 = scalar_lea.vmem [#allocation4], %s385
        %p387 = pneg %p66
        %p388 = pneg %p63
        %p389 = pneg %p87
        %p390 = pneg %p84
        %p391 = pneg %p108
        %p392 = pneg %p105
        %p393 = pneg %p129
        %p394 = pneg %p126
        %p395 = pneg %p150
        %p396 = pneg %p147
        %p397 = scmp.lt.s32.totalorder %s36, 1
        %s398 = scalar_select %p397, %s36, 1
        %s399 = smul.addr %s398, 2
        %s400 = smul.addr %s399, 4
        %s401 = scalar_lea.vmem %s5, %s400
        %p402 = pneg %p176
        %p403 = pneg %p173
        %p404 = scmp.lt.s32.totalorder %s36, 1
        %s405 = scalar_select %p404, %s36, 1
        %s406 = smul.addr %s405, 2
        %s407 = smul.addr %s406, 4
        %s408 = scalar_lea.vmem %s6, %s407
        %p409 = pneg %p202
        %p410 = pneg %p199
        %p411 = pneg %p228
        %p412 = pneg %p225
        %s413 = sand.u32 %s215, 1
        %s414 = scalar_lea.sflag [#allocation6], %s413
        %s415 = sand.u32 %s215, 1
        %s416 = smul.addr %s415, 16
        %s417 = scalar_lea.vmem [#allocation12], %s416
        %p418 = pneg %p254
        %p419 = pneg %p251
        %s420 = sand.u32 %s241, 1
        %s421 = scalar_lea.sflag [#allocation14], %s420
        %s422 = sand.u32 %s241, 1
        %s423 = smul.addr %s422, 16
        %s424 = scalar_lea.vmem [#allocation13], %s423
        %p425 = scmp.lt.s32.totalorder %s36, 1
        %s426 = scalar_select %p425, %s36, 1
        %s427 = smul.addr %s426, 2
        %s428 = smul.addr %s427, 4
        %s429 = scalar_lea.vmem %s5, %s428
        %p430 = scmp.lt.s32.totalorder %s36, 1
        %s431 = scalar_select %p430, %s36, 1
        %s432 = smul.addr %s431, 2
        %s433 = smul.addr %s432, 4
        %s434 = scalar_lea.vmem %s6, %s433
        %v436 = vld [vmem:[#allocation7] sm:$0xf]
        %v437 = vld [vmem:[#allocation7 + $0x4] sm:$0xf]
        %v438 = vld [vmem:[#allocation9] sm:$0xf]
        %v439 = vld [vmem:[#allocation9 + $0x4] sm:$0xf]
        %v440 = vld [vmem:[%s365] sm:$0xf]
        %v441 = vld [vmem:[%s365 + $0x4] sm:$0xf]
        %v442 = vld [vmem:[#allocation10] sm:$0xf]
        %v443 = vld [vmem:[#allocation10 + $0x4] sm:$0xf]
        %v446 = vunpack.c.l.b16 %v440
        %v447 = vunpack.c.l.b16 %v441
        %v448 = vpack.c.b16 %v447, %v446
        %v451 = vunpack.c.l.b16 %v442
        %v452 = vunpack.c.l.b16 %v443
        %v453 = vpack.c.b16 %v452, %v451
        %vm455 = vcmask 130048
        %v457 = vsel %vm455, %v448, 0
        %459 = vmatprep.subr.bf16.mxu0 0
        %460 = vmatpush1.bf16.msra.mxu0 0
        %461 = vmatprep.subr.bf16.mxu0 0
        %462 = vmatpush1.bf16.msra.mxu0 0
        %463 = vmatprep.subr.bf16.mxu0 0
        %464 = vmatpush1.bf16.msra.mxu0 0
        %465 = vmatprep.subr.bf16.mxu0 0
        %466 = vmatpush1.bf16.msra.mxu0 0
        %467 = vmatprep.subr.bf16.mxu0 0
        %468 = vmatpush1.bf16.msra.mxu0 0
        %469 = vmatprep.subr.bf16.mxu0 0
        %470 = vmatpush1.bf16.msra.mxu0 0
        %471 = vmatprep.subr.bf16.mxu0 0
        %472 = vmatpush1.bf16.msra.mxu0 0
        %473 = vmatprep.subr.bf16.mxu0 0
        %474 = vmatpush1.bf16.msra.mxu0 %v453
        %475 = vmatprep.subr.bf16.mxu0 0
        %476 = vmatpush2.bf16.msra.mxu0 0
        %477 = vmatprep.subr.bf16.mxu0 0
        %478 = vmatpush2.bf16.msra.mxu0 0
        %479 = vmatprep.subr.bf16.mxu0 0
        %480 = vmatpush2.bf16.msra.mxu0 0
        %481 = vmatprep.subr.bf16.mxu0 0
        %482 = vmatpush2.bf16.msra.mxu0 0
        %483 = vmatprep.subr.bf16.mxu0 0
        %484 = vmatpush2.bf16.msra.mxu0 0
        %485 = vmatprep.subr.bf16.mxu0 0
        %486 = vmatpush2.bf16.msra.mxu0 0
        %487 = vmatprep.subr.bf16.mxu0 0
        %488 = vmatpush2.bf16.msra.mxu0 0
        %489 = vmatprep.subr.bf16.mxu0 0
        %490 = vmatpush2.bf16.msra.mxu0 0
        %491 = vmatprep.mubr.bf16.mxu0 0
        %492 = vmatmul.mubr.bf16.gmra.mxu0 %v457
        %v493 = vpop.f32.mrf.mxu0
        %v494 = vadd.f32 0.0, %v493
        %v495 = vpop.f32.mrf.mxu0
        %v496 = vpop.f32.mrf.mxu0
        %v497 = vadd.f32 0.0, %v496
        %v498 = vpop.f32.mrf.mxu0
        %499 = vdwg.mxu0
        %v500 = vpack.c.bf16 %v497, %v494
        %v503 = vunpack.c.l.b16 %v436
        %v504 = vunpack.c.l.b16 %v437
        %v505 = vpack.c.b16 %v504, %v503
        %v507 = vsel %vm455, %v505, 0
        %509 = vmatprep.subr.bf16.mxu0 0
        %510 = vmatpush1.bf16.msra.mxu0 0
        %511 = vmatprep.subr.bf16.mxu0 0
        %512 = vmatpush1.bf16.msra.mxu0 0
        %513 = vmatprep.subr.bf16.mxu0 0
        %514 = vmatpush1.bf16.msra.mxu0 0
        %515 = vmatprep.subr.bf16.mxu0 0
        %516 = vmatpush1.bf16.msra.mxu0 0
        %517 = vmatprep.subr.bf16.mxu0 0
        %518 = vmatpush1.bf16.msra.mxu0 0
        %519 = vmatprep.subr.bf16.mxu0 0
        %520 = vmatpush1.bf16.msra.mxu0 0
        %521 = vmatprep.subr.bf16.mxu0 0
        %522 = vmatpush1.bf16.msra.mxu0 0
        %523 = vmatprep.subr.bf16.mxu0 0
        %524 = vmatpush1.bf16.msra.mxu0 %v500
        %525 = vmatprep.subr.bf16.mxu0 0
        %526 = vmatpush2.bf16.msra.mxu0 0
        %527 = vmatprep.subr.bf16.mxu0 0
        %528 = vmatpush2.bf16.msra.mxu0 0
        %529 = vmatprep.subr.bf16.mxu0 0
        %530 = vmatpush2.bf16.msra.mxu0 0
        %531 = vmatprep.subr.bf16.mxu0 0
        %532 = vmatpush2.bf16.msra.mxu0 0
        %533 = vmatprep.subr.bf16.mxu0 0
        %534 = vmatpush2.bf16.msra.mxu0 0
        %535 = vmatprep.subr.bf16.mxu0 0
        %536 = vmatpush2.bf16.msra.mxu0 0
        %537 = vmatprep.subr.bf16.mxu0 0
        %538 = vmatpush2.bf16.msra.mxu0 0
        %539 = vmatprep.subr.bf16.mxu0 0
        %540 = vmatpush2.bf16.msra.mxu0 0
        %541 = vmatprep.mubr.bf16.mxu0 0
        %542 = vmatmul.mubr.bf16.gmra.mxu0 %v507
        %v543 = vpop.f32.mrf.mxu0
        %v544 = vadd.f32 0.0, %v543
        %v545 = vpop.f32.mrf.mxu0
        %v546 = vpop.f32.mrf.mxu0
        %v547 = vadd.f32 0.0, %v546
        %v548 = vpop.f32.mrf.mxu0
        %549 = vdwg.mxu0
        %v552 = vunpack.c.l.b16 %v438
        %v553 = vunpack.c.l.b16 %v439
        %v554 = vpack.c.b16 %v553, %v552
        %v556 = vsel %vm455, %v554, 0
        %558 = vmatprep.subr.bf16.mxu0 0
        %559 = vmatpush1.bf16.msra.mxu0 0
        %560 = vmatprep.subr.bf16.mxu0 0
        %561 = vmatpush1.bf16.msra.mxu0 0
        %562 = vmatprep.subr.bf16.mxu0 0
        %563 = vmatpush1.bf16.msra.mxu0 0
        %564 = vmatprep.subr.bf16.mxu0 0
        %565 = vmatpush1.bf16.msra.mxu0 0
        %566 = vmatprep.subr.bf16.mxu0 0
        %567 = vmatpush1.bf16.msra.mxu0 0
        %568 = vmatprep.subr.bf16.mxu0 0
        %569 = vmatpush1.bf16.msra.mxu0 0
        %570 = vmatprep.subr.bf16.mxu0 0
        %571 = vmatpush1.bf16.msra.mxu0 0
        %572 = vmatprep.subr.bf16.mxu0 0
        %573 = vmatpush1.bf16.msra.mxu0 %v500
        %574 = vmatprep.subr.bf16.mxu0 0
        %575 = vmatpush2.bf16.msra.mxu0 0
        %576 = vmatprep.subr.bf16.mxu0 0
        %577 = vmatpush2.bf16.msra.mxu0 0
        %578 = vmatprep.subr.bf16.mxu0 0
        %579 = vmatpush2.bf16.msra.mxu0 0
        %580 = vmatprep.subr.bf16.mxu0 0
        %581 = vmatpush2.bf16.msra.mxu0 0
        %582 = vmatprep.subr.bf16.mxu0 0
        %583 = vmatpush2.bf16.msra.mxu0 0
        %584 = vmatprep.subr.bf16.mxu0 0
        %585 = vmatpush2.bf16.msra.mxu0 0
        %586 = vmatprep.subr.bf16.mxu0 0
        %587 = vmatpush2.bf16.msra.mxu0 0
        %588 = vmatprep.subr.bf16.mxu0 0
        %589 = vmatpush2.bf16.msra.mxu0 0
        %590 = vmatprep.mubr.bf16.mxu0 0
        %591 = vmatmul.mubr.bf16.gmra.mxu0 %v556
        %v592 = vpop.f32.mrf.mxu0
        %v593 = vadd.f32 0.0, %v592
        %v594 = vpop.f32.mrf.mxu0
        %v595 = vpop.f32.mrf.mxu0
        %v596 = vadd.f32 0.0, %v595
        %v597 = vpop.f32.mrf.mxu0
        %598 = vdwg.mxu0
        %601 = vrot.lane.b32.xlu0 %v593, 112
        %v602 = vpop.permute.xlu0 %601
        %603 = vrot.lane.b32.xlu0 %v596, 112
        %v604 = vpop.permute.xlu0 %603
        %v607 = vsub.f32 %v544, %v602
        %v608 = vsub.f32 %v547, %v604
        %611 = vrot.lane.b32.xlu0 %v544, 112
        %v612 = vpop.permute.xlu0 %611
        %613 = vrot.lane.b32.xlu0 %v547, 112
        %v614 = vpop.permute.xlu0 %613
        %v617 = vadd.f32 %v593, %v612
        %v618 = vadd.f32 %v596, %v614
        %621 = vrot.lane.b32.xlu0 %v617, 16
        %v622 = vpop.permute.xlu0 %621
        %623 = vrot.lane.b32.xlu0 %v618, 16
        %v624 = vpop.permute.xlu0 %623
        %v627 = vsel %vm455, %v607, %v622
        %v628 = vsel %vm455, %v608, %v624
        %p629 = scmp.eq.s32.totalorder %s36, 0
        // Predicated region
        $region65: #{tpu_custom_call.1} parent=47 // pred_check
          %p630 = pneg %p629
        $region66: #{tpu_custom_call.1} parent=47 // pred_check_branch
          %632 = sbr.rel (%p630) target = $region68
        $region67: #{tpu_custom_call.1} parent=47 // pred_region
          %vm633 = vcmask 261120
          %634 = vst.msk [vmem:[#allocation2] sm:$0xff] %vm633, 0.0
          %635 = vst.msk [vmem:[#allocation2 + $0x8] sm:$0xff] %vm633, 0.0
          %636 = vst.msk [vmem:[#allocation3] sm:$0xff] %vm633, 0.0
          %637 = vst.msk [vmem:[#allocation3 + $0x8] sm:$0xff] %vm633, 0.0
        $region68: #{tpu_custom_call.1} parent=47 // pred_fallthru
          _
        %v638 = vld [vmem:[#allocation2] sm:$0xff]
        %v639 = vld [vmem:[#allocation2 + $0x8] sm:$0xff]
        %v640 = vld [vmem:[%s429] sm:$0xf]
        %v641 = vld [vmem:[%s429 + $0x4] sm:$0xf]
        %v642 = vunpack.c.l.bf16 %v640
        %v643 = vunpack.c.l.bf16 %v641
        %v644 = vmul.f32 %v642, %v627
        %v645 = vmul.f32 %v643, %v628
        %v646 = vadd.f32 %v638, %v644
        %v647 = vadd.f32 %v639, %v645
        %vm648 = vcmask 261120
        %649 = vst.msk [vmem:[#allocation2] sm:$0xff] %vm648, %v646
        %650 = vst.msk [vmem:[#allocation2 + $0x8] sm:$0xff] %vm648, %v647
        %v651 = vld [vmem:[#allocation3] sm:$0xff]
        %v652 = vld [vmem:[#allocation3 + $0x8] sm:$0xff]
        %v653 = vld [vmem:[%s434] sm:$0xf]
        %v654 = vld [vmem:[%s434 + $0x4] sm:$0xf]
        %v655 = vunpack.c.l.bf16 %v653
        %v656 = vunpack.c.l.bf16 %v654
        %v657 = vmul.f32 %v655, %v627
        %v658 = vmul.f32 %v656, %v628
        %v659 = vadd.f32 %v651, %v657
        %v660 = vadd.f32 %v652, %v658
        %661 = vst.msk [vmem:[#allocation3] sm:$0xff] %vm648, %v659
        %662 = vst.msk [vmem:[#allocation3 + $0x8] sm:$0xff] %vm648, %v660
        %p663 = scmp.eq.s32.totalorder %s36, 1
        // Predicated region
        $region69: #{tpu_custom_call.1} parent=47 // pred_check
          %p664 = pneg %p663
        $region70: #{tpu_custom_call.1} parent=47 // pred_check_branch
          %666 = sbr.rel (%p664) target = $region72
        $region71: #{tpu_custom_call.1} parent=47 // pred_region
          %v667 = vld [vmem:[#allocation2] sm:$0xff]
          %v668 = vld [vmem:[#allocation2 + $0x8] sm:$0xff]
          %v669 = vld [vmem:[#allocation3] sm:$0xff]
          %v670 = vld [vmem:[#allocation3 + $0x8] sm:$0xff]
          %673 = vrot.lane.b32.xlu0 %v669, 32
          %v674 = vpop.permute.xlu0 %673
          %675 = vrot.lane.b32.xlu0 %v670, 32
          %v676 = vpop.permute.xlu0 %675
          %v679 = vsel %vm648, %v667, %v674
          %v680 = vsel %vm648, %v668, %v676
          %v681 = vpack.c.bf16 %v680, %v679
          %682 = vmatprep.subr.bf16.mxu0 0
          %683 = vmatpush1.bf16.msra.mxu0 0
          %684 = vmatprep.subr.bf16.mxu0 0
          %685 = vmatpush1.bf16.msra.mxu0 0
          %686 = vmatprep.subr.bf16.mxu0 0
          %687 = vmatpush1.bf16.msra.mxu0 0
          %688 = vmatprep.subr.bf16.mxu0 0
          %689 = vmatpush1.bf16.msra.mxu0 0
          %690 = vmatprep.subr.bf16.mxu0 0
          %691 = vmatpush1.bf16.msra.mxu0 0
          %692 = vmatprep.subr.bf16.mxu0 0
          %693 = vmatpush1.bf16.msra.mxu0 0
          %694 = vmatprep.subr.bf16.mxu0 0
          %695 = vmatpush1.bf16.msra.mxu0 0
          %696 = vmatprep.subr.bf16.mxu0 0
          %697 = vmatpush1.bf16.msra.mxu0 %v681
          %698 = vmatprep.subr.bf16.mxu0 0
          %699 = vmatpush2.bf16.msra.mxu0 0
          %700 = vmatprep.subr.bf16.mxu0 0
          %701 = vmatpush2.bf16.msra.mxu0 0
          %702 = vmatprep.subr.bf16.mxu0 0
          %703 = vmatpush2.bf16.msra.mxu0 0
          %704 = vmatprep.subr.bf16.mxu0 0
          %705 = vmatpush2.bf16.msra.mxu0 0
          %706 = vmatprep.subr.bf16.mxu0 0
          %707 = vmatpush2.bf16.msra.mxu0 0
          %708 = vmatprep.subr.bf16.mxu0 0
          %709 = vmatpush2.bf16.msra.mxu0 0
          %710 = vmatprep.subr.bf16.mxu0 0
          %711 = vmatpush2.bf16.msra.mxu0 0
          %712 = vmatprep.subr.bf16.mxu0 0
          %713 = vmatpush2.bf16.msra.mxu0 0
          %714 = vmatprep.mubr.bf16.mxu0 0
          %715 = vmatmul.mubr.bf16.gmra.mxu0 %v507
          %v716 = vpop.f32.mrf.mxu0
          %v717 = vadd.f32 0.0, %v716
          %v718 = vpop.f32.mrf.mxu0
          %v719 = vpop.f32.mrf.mxu0
          %v720 = vadd.f32 0.0, %v719
          %v721 = vpop.f32.mrf.mxu0
          %722 = vdwg.mxu0
          %723 = vmatprep.subr.bf16.mxu0 0
          %724 = vmatpush1.bf16.msra.mxu0 0
          %725 = vmatprep.subr.bf16.mxu0 0
          %726 = vmatpush1.bf16.msra.mxu0 0
          %727 = vmatprep.subr.bf16.mxu0 0
          %728 = vmatpush1.bf16.msra.mxu0 0
          %729 = vmatprep.subr.bf16.mxu0 0
          %730 = vmatpush1.bf16.msra.mxu0 0
          %731 = vmatprep.subr.bf16.mxu0 0
          %732 = vmatpush1.bf16.msra.mxu0 0
          %733 = vmatprep.subr.bf16.mxu0 0
          %734 = vmatpush1.bf16.msra.mxu0 0
          %735 = vmatprep.subr.bf16.mxu0 0
          %736 = vmatpush1.bf16.msra.mxu0 0
          %737 = vmatprep.subr.bf16.mxu0 0
          %738 = vmatpush1.bf16.msra.mxu0 %v681
          %739 = vmatprep.subr.bf16.mxu0 0
          %740 = vmatpush2.bf16.msra.mxu0 0
          %741 = vmatprep.subr.bf16.mxu0 0
          %742 = vmatpush2.bf16.msra.mxu0 0
          %743 = vmatprep.subr.bf16.mxu0 0
          %744 = vmatpush2.bf16.msra.mxu0 0
          %745 = vmatprep.subr.bf16.mxu0 0
          %746 = vmatpush2.bf16.msra.mxu0 0
          %747 = vmatprep.subr.bf16.mxu0 0
          %748 = vmatpush2.bf16.msra.mxu0 0
          %749 = vmatprep.subr.bf16.mxu0 0
          %750 = vmatpush2.bf16.msra.mxu0 0
          %751 = vmatprep.subr.bf16.mxu0 0
          %752 = vmatpush2.bf16.msra.mxu0 0
          %753 = vmatprep.subr.bf16.mxu0 0
          %754 = vmatpush2.bf16.msra.mxu0 0
          %755 = vmatprep.mubr.bf16.mxu0 0
          %756 = vmatmul.mubr.bf16.gmra.mxu0 %v556
          %v757 = vpop.f32.mrf.mxu0
          %v758 = vadd.f32 0.0, %v757
          %v759 = vpop.f32.mrf.mxu0
          %v760 = vpop.f32.mrf.mxu0
          %v761 = vadd.f32 0.0, %v760
          %v762 = vpop.f32.mrf.mxu0
          %763 = vdwg.mxu0
          %v764 = vld [vmem:[%s4] sm:$0xf]
          %v765 = vld [vmem:[%s4 + $0x4] sm:$0xf]
          %v766 = vld [vmem:[%s4 + $0x8] sm:$0xf]
          %v767 = vld [vmem:[%s4 + $0xc] sm:$0xf]
          %770 = vrot.lane.b32.xlu0 %v758, 112
          %v771 = vpop.permute.xlu0 %770
          %772 = vrot.lane.b32.xlu0 %v761, 112
          %v773 = vpop.permute.xlu0 %772
          %v776 = vadd.f32 %v717, %v771
          %v777 = vadd.f32 %v720, %v773
          %780 = vrot.lane.b32.xlu0 %v717, 112
          %v781 = vpop.permute.xlu0 %780
          %782 = vrot.lane.b32.xlu0 %v720, 112
          %v783 = vpop.permute.xlu0 %782
          %v786 = vsub.f32 %v758, %v781
          %v787 = vsub.f32 %v761, %v783
          %790 = vrot.lane.b32.xlu0 %v786, 16
          %v791 = vpop.permute.xlu0 %790
          %792 = vrot.lane.b32.xlu0 %v787, 16
          %v793 = vpop.permute.xlu0 %792
          %v796 = vsel %vm455, %v776, %v791
          %v797 = vsel %vm455, %v777, %v793
          %v798 = vpack.c.bf16 %v797, %v796
          %v803 = vunpack.c.l.b16 %v764
          %v804 = vunpack.c.l.b16 %v765
          %v805 = vunpack.c.l.b16 %v766
          %v806 = vunpack.c.l.b16 %v767
          %v807 = vpack.c.b16 %v804, %v803
          %v808 = vpack.c.b16 %v806, %v805
          %v812 = vsel %vm648, %v798, 0
          %814 = vmatprep.subr.bf16.mxu0 0
          %815 = vmatpush1.bf16.msra.mxu0 0
          %816 = vmatprep.subr.bf16.mxu0 0
          %817 = vmatpush1.bf16.msra.mxu0 0
          %818 = vmatprep.subr.bf16.mxu0 0
          %819 = vmatpush1.bf16.msra.mxu0 0
          %820 = vmatprep.subr.bf16.mxu0 0
          %821 = vmatpush1.bf16.msra.mxu0 0
          %822 = vmatprep.subr.bf16.mxu0 0
          %823 = vmatpush1.bf16.msra.mxu0 0
          %824 = vmatprep.subr.bf16.mxu0 0
          %825 = vmatpush1.bf16.msra.mxu0 0
          %826 = vmatprep.subr.bf16.mxu0 0
          %827 = vmatpush1.bf16.msra.mxu0 %v808
          %828 = vmatprep.subr.bf16.mxu0 0
          %829 = vmatpush1.bf16.msra.mxu0 %v807
          %830 = vmatprep.subr.bf16.mxu0 0
          %831 = vmatpush2.bf16.msra.mxu0 0
          %832 = vmatprep.subr.bf16.mxu0 0
          %833 = vmatpush2.bf16.msra.mxu0 0
          %834 = vmatprep.subr.bf16.mxu0 0
          %835 = vmatpush2.bf16.msra.mxu0 0
          %836 = vmatprep.subr.bf16.mxu0 0
          %837 = vmatpush2.bf16.msra.mxu0 0
          %838 = vmatprep.subr.bf16.mxu0 0
          %839 = vmatpush2.bf16.msra.mxu0 0
          %840 = vmatprep.subr.bf16.mxu0 0
          %841 = vmatpush2.bf16.msra.mxu0 0
          %842 = vmatprep.subr.bf16.mxu0 0
          %843 = vmatpush2.bf16.msra.mxu0 0
          %844 = vmatprep.subr.bf16.mxu0 0
          %845 = vmatpush2.bf16.msra.mxu0 0
          %846 = vmatprep.mubr.bf16.mxu0 0
          %847 = vmatmul.mubr.bf16.gmra.mxu0 %v812
          %v848 = vpop.f32.mrf.mxu0
          %v849 = vadd.f32 0.0, %v848
          %v850 = vpop.f32.mrf.mxu0
          %v851 = vpop.f32.mrf.mxu0
          %v852 = vadd.f32 0.0, %v851
          %v853 = vpop.f32.mrf.mxu0
          %854 = vdwg.mxu0
          %855 = vst.msk [vmem:[%s417] sm:$0xff] %vm455, %v849
          %856 = vst.msk [vmem:[%s417 + $0x8] sm:$0xff] %vm455, %v852
          %859 = vrot.lane.b32.xlu0 %v776, 96
          %v860 = vpop.permute.xlu0 %859
          %861 = vrot.lane.b32.xlu0 %v777, 96
          %v862 = vpop.permute.xlu0 %861
          %865 = vrot.lane.b32.xlu0 %v786, 112
          %v866 = vpop.permute.xlu0 %865
          %867 = vrot.lane.b32.xlu0 %v787, 112
          %v868 = vpop.permute.xlu0 %867
          %v871 = vsel %vm455, %v860, %v866
          %v872 = vsel %vm455, %v862, %v868
          %v873 = vpack.c.bf16 %v872, %v871
          %v875 = vsel %vm648, %v873, 0
          %877 = vmatprep.subr.bf16.mxu0 0
          %878 = vmatpush1.bf16.msra.mxu0 0
          %879 = vmatprep.subr.bf16.mxu0 0
          %880 = vmatpush1.bf16.msra.mxu0 0
          %881 = vmatprep.subr.bf16.mxu0 0
          %882 = vmatpush1.bf16.msra.mxu0 0
          %883 = vmatprep.subr.bf16.mxu0 0
          %884 = vmatpush1.bf16.msra.mxu0 0
          %885 = vmatprep.subr.bf16.mxu0 0
          %886 = vmatpush1.bf16.msra.mxu0 0
          %887 = vmatprep.subr.bf16.mxu0 0
          %888 = vmatpush1.bf16.msra.mxu0 0
          %889 = vmatprep.subr.bf16.mxu0 0
          %890 = vmatpush1.bf16.msra.mxu0 %v808
          %891 = vmatprep.subr.bf16.mxu0 0
          %892 = vmatpush1.bf16.msra.mxu0 %v807
          %893 = vmatprep.subr.bf16.mxu0 0
          %894 = vmatpush2.bf16.msra.mxu0 0
          %895 = vmatprep.subr.bf16.mxu0 0
          %896 = vmatpush2.bf16.msra.mxu0 0
          %897 = vmatprep.subr.bf16.mxu0 0
          %898 = vmatpush2.bf16.msra.mxu0 0
          %899 = vmatprep.subr.bf16.mxu0 0
          %900 = vmatpush2.bf16.msra.mxu0 0
          %901 = vmatprep.subr.bf16.mxu0 0
          %902 = vmatpush2.bf16.msra.mxu0 0
          %903 = vmatprep.subr.bf16.mxu0 0
          %904 = vmatpush2.bf16.msra.mxu0 0
          %905 = vmatprep.subr.bf16.mxu0 0
          %906 = vmatpush2.bf16.msra.mxu0 0
          %907 = vmatprep.subr.bf16.mxu0 0
          %908 = vmatpush2.bf16.msra.mxu0 0
          %909 = vmatprep.mubr.bf16.mxu0 0
          %910 = vmatmul.mubr.bf16.gmra.mxu0 %v875
          %v911 = vpop.f32.mrf.mxu0
          %v912 = vadd.f32 0.0, %v911
          %v913 = vpop.f32.mrf.mxu0
          %v914 = vpop.f32.mrf.mxu0
          %v915 = vadd.f32 0.0, %v914
          %v916 = vpop.f32.mrf.mxu0
          %917 = vdwg.mxu0
          %918 = vst.msk [vmem:[%s424] sm:$0xff] %vm455, %v912
          %919 = vst.msk [vmem:[%s424 + $0x8] sm:$0xff] %vm455, %v915
        $region72: #{tpu_custom_call.1} parent=47 // pred_fallthru
          _
        %s920 = sand.u32 %s215, 1
        %s921 = scalar_lea.sflag [#allocation6], %s920
        %s922 = sand.u32 %s215, 1
        %s923 = smul.addr %s922, 16
        %s924 = scalar_lea.vmem [#allocation12], %s923
        %s925 = sand.u32 %s241, 1
        %s926 = scalar_lea.sflag [#allocation14], %s925
        %s927 = sand.u32 %s241, 1
        %s928 = smul.addr %s927, 16
        %s929 = scalar_lea.vmem [#allocation13], %s928
        // Predicated region
        $region73: #{tpu_custom_call.1} parent=47 // pred_check
          %p930 = pneg %p225
        $region74: #{tpu_custom_call.1} parent=47 // pred_check_branch
          %932 = sbr.rel (%p930) target = $region76
        $region75: #{tpu_custom_call.1} parent=47 // pred_region
          %s934 = ssub.s32 256, 256
          %935 = vsyncadd %s921, %s934
          %s936 = smul.addr %s35, 2
          %s937 = smul.addr %s936, 128
          %s938 = scalar_lea.hbm %s7, %s937
          %s939 = sshll.u32 %s924, 4
          %s940 = int_to_ptr.vmem [resolvable:$true] %s939
          %945 = dma.vmem_to_hbm [thread:$0]  %s940, 256, %s938, %s921, 128, 128, 8
        $region76: #{tpu_custom_call.1} parent=47 // pred_fallthru
          _
        // Predicated region
        $region77: #{tpu_custom_call.1} parent=47 // pred_check
          %p946 = pneg %p251
        $region78: #{tpu_custom_call.1} parent=47 // pred_check_branch
          %948 = sbr.rel (%p946) target = $region80
        $region79: #{tpu_custom_call.1} parent=47 // pred_region
          %s950 = ssub.s32 256, 256
          %951 = vsyncadd %s926, %s950
          %s952 = smul.addr %s35, 2
          %s953 = smul.addr %s952, 128
          %s954 = scalar_lea.hbm %s8, %s953
          %s955 = sshll.u32 %s929, 4
          %s956 = int_to_ptr.vmem [resolvable:$true] %s955
          %961 = dma.vmem_to_hbm [thread:$0]  %s956, 256, %s954, %s926, 128, 128, 8
        $region80: #{tpu_custom_call.1} parent=47 // pred_fallthru
          _
      $region48: #{tpu_custom_call.1} parent=5 // pred_fallthru
        _
      %p962 = scmp.le.s32.totalorder 2, %s26
      // Predicated region
      $region81: #{tpu_custom_call.1} parent=5 // pred_check
        %p963 = pneg %p962
      $region82: #{tpu_custom_call.1} parent=5 // pred_check_branch
        %965 = sbr.rel (%p963) target = $region84
      $region83: #{tpu_custom_call.1} parent=5 // pred_region
        %s966 = ssub.s32 %s26, 2
        // Predicated region
        $region85: #{tpu_custom_call.1} parent=83 // pred_check
          %p967 = pneg %p231
        $region86: #{tpu_custom_call.1} parent=83 // pred_check_branch
          %969 = sbr.rel (%p967) target = $region88
        $region87: #{tpu_custom_call.1} parent=83 // pred_region
          %s970 = sand.u32 %s216, 1
          %s971 = scalar_lea.sflag [#allocation6], %s970
          %s972 = sand.u32 %s216, 1
          %s973 = smul.addr %s972, 16
          %s974 = scalar_lea.vmem [#allocation12], %s973
          %975 = dma.done %s971, 256
        $region88: #{tpu_custom_call.1} parent=83 // pred_fallthru
          _
        // Predicated region
        $region89: #{tpu_custom_call.1} parent=83 // pred_check
          %p976 = pneg %p257
        $region90: #{tpu_custom_call.1} parent=83 // pred_check_branch
          %978 = sbr.rel (%p976) target = $region92
        $region91: #{tpu_custom_call.1} parent=83 // pred_region
          %s979 = sand.u32 %s242, 1
          %s980 = scalar_lea.sflag [#allocation14], %s979
          %s981 = sand.u32 %s242, 1
          %s982 = smul.addr %s981, 16
          %s983 = scalar_lea.vmem [#allocation13], %s982
          %984 = dma.done %s980, 256
        $region92: #{tpu_custom_call.1} parent=83 // pred_fallthru
          _
      $region84: #{tpu_custom_call.1} parent=5 // pred_fallthru
        _
    $region6: #{tpu_custom_call.1} parent=1 // loop_footer
      %s30 = sadd.s32 1, %s26
    $region7: #{tpu_custom_call.1} parent=1 // loop_footer_branch
      %25 = sbr.rel target = $region3
    $region8: #{tpu_custom_call.1} parent=1 // loop_exit
      _
    %985 = vsyncpa [#allocation5], 1
    %s986 = scalar_lea.sflag [#allocation5], 1
    %987 = vsyncpa %s986, 1
    %988 = vsyncpa [#allocation8], 1
    %989 = vsyncpa [#allocation11], 1
    %990 = vsyncpa [#allocation6], 1
    %s991 = scalar_lea.sflag [#allocation6], 1
    %992 = vsyncpa %s991, 1
    %993 = vsyncpa [#allocation14], 1
    %s994 = scalar_lea.sflag [#allocation14], 1
    %995 = vsyncpa %s994, 1

// kernel: tpu_custom_call.1
$region0: #{tpu_custom_call.1}
  #allocation0 [shape = 'u32[]', space=smem, size = 0x4, offset = 0x4, fixed_abs, tag = 'smem constant byte address 0x4 - core index']
  #allocation1 [shape = 'u32[144,128]{1,0:T(1,128)}', space=vmem, size = 0x12000, scoped, tag = 'internal scratch']
  #allocation2 [shape = 'f32[16,32]{1,0:T(8,128)}', space=vmem, size = 0x2000, scoped, tag = 'scratch operand']
  #allocation3 [shape = 'f32[16,32]{1,0:T(8,128)}', space=vmem, size = 0x2000, scoped, tag = 'scratch operand']
  %s0 = inlined_call_operand.hbm [shape: bf16[2,2,16,16], index: 0, kind: input, shape index: {}]
  %s1 = inlined_call_operand.hbm [shape: bf16[16,16], index: 1, kind: input, shape index: {}]
  %s2 = inlined_call_operand.hbm [shape: bf16[16,16], index: 2, kind: input, shape index: {}]
  %s3 = inlined_call_operand.hbm [shape: bf16[16,32], index: 3, kind: input, shape index: {}]
  %s4 = inlined_call_operand.vmem [shape: bf16[32,16], index: 4, kind: input, shape index: {}]
  %s5 = inlined_call_operand.vmem [shape: bf16[2,16,32], index: 5, kind: input, shape index: {}]
  %s6 = inlined_call_operand.vmem [shape: bf16[2,16,32], index: 6, kind: input, shape index: {}]
  %s7 = inlined_call_operand.hbm [shape: f32[2,16,16], index: 7, kind: output, shape index: {0}]
  %s8 = inlined_call_operand.hbm [shape: f32[2,16,16], index: 8, kind: output, shape index: {1}]
  %9 = xla_tuple %s7, %s8
  %s10 = sld [smem:[#allocation0]]
  $region93: #{tpu_custom_call.1} parent=0
    _
  %s12 = ssub.s32 1, %s10
  %s13 = scalar_select 0, %s12, %s10
  $region1: #{tpu_custom_call.1} parent=0
    #allocation4 [shape = 'u8[8192]{0}', space=vmem, size = 0x2000, scoped, tag = 'input window, operand 0']
    #allocation5 [shape = 's32[2]{0}', space=sflag, size = 0x8, scoped, tag = 'scoped memory for tpu_custom_call.1']
    #allocation6 [shape = 's32[2]{0}', space=sflag, size = 0x8, scoped, tag = 'scoped memory for tpu_custom_call.1']
    #allocation7 [shape = 'u8[4096]{0}', space=vmem, size = 0x1000, scoped, tag = 'input window, operand 1, single buffered']
    #allocation8 [shape = 's32[1]{0}', space=sflag, size = 0x4, scoped, tag = 'scoped memory for tpu_custom_call.1']
    #allocation9 [shape = 'u8[4096]{0}', space=vmem, size = 0x1000, scoped, tag = 'input window, operand 2, single buffered']
    #allocation10 [shape = 'u8[4096]{0}', space=vmem, size = 0x1000, scoped, tag = 'input window, operand 3, single buffered']
    #allocation11 [shape = 's32[1]{0}', space=sflag, size = 0x4, scoped, tag = 'scoped memory for tpu_custom_call.1']
    #allocation12 [shape = 'u8[16384]{0}', space=vmem, size = 0x4000, scoped, tag = 'output window, operand 0']
    #allocation13 [shape = 'u8[16384]{0}', space=vmem, size = 0x4000, scoped, tag = 'output window, operand 1']
    #allocation14 [shape = 's32[2]{0}', space=sflag, size = 0x8, scoped, tag = 'scoped memory for tpu_custom_call.1']
    %14 = vsyncpa [#allocation5], 0
    %s15 = scalar_lea.sflag [#allocation5], 1
    %16 = vsyncpa %s15, 0
    %17 = vsyncpa [#allocation8], 0
    %18 = vsyncpa [#allocation11], 0
    %19 = vsyncpa [#allocation6], 0
    %s20 = scalar_lea.sflag [#allocation6], 1
    %21 = vsyncpa %s20, 0
    %22 = vsyncpa [#allocation14], 0
    %s23 = scalar_lea.sflag [#allocation14], 1
    %24 = vsyncpa %s23, 0
    loop: start=0, step=1, limit=6
    $region2: #{tpu_custom_call.1} parent=1 // loop_pre_header
      _
    $region3: #{tpu_custom_call.1} parent=1 // loop_header
      %s26 = sphi 0, %s30
      %p27 = scmp.ge.s32.totalorder %s26, 6
      %s33 = sphi 0, %s45
      %s34 = sphi 0, %s41
      %s35 = sphi 0, %s33
      %s36 = sphi 0, %s34
      %s37 = sphi 0, %s35
      %s38 = sphi 0, %s36
      %s50 = sphi 0, %s52
      %s53 = sphi 0, %s50
      %s54 = sphi 0, %s53
      %s70 = sphi 0, %s54
      %s74 = sphi 0, %s74
      %s76 = sphi 0, %s74
      %s77 = sphi 0, %s76
      %s91 = sphi 0, %s77
      %s95 = sphi 0, %s95
      %s97 = sphi 0, %s95
      %s98 = sphi 0, %s97
      %s112 = sphi 0, %s98
      %s116 = sphi 0, %s116
      %s118 = sphi 0, %s116
      %s119 = sphi 0, %s118
      %s133 = sphi 0, %s119
      %s137 = sphi 0, %s137
      %s139 = sphi 0, %s137
      %s140 = sphi 0, %s139
      %s154 = sphi 0, %s140
      %s160 = sphi 0, %s162
      %s163 = sphi 0, %s160
      %s164 = sphi 0, %s163
      %s180 = sphi 0, %s164
      %s186 = sphi 0, %s188
      %s189 = sphi 0, %s186
      %s190 = sphi 0, %s189
      %s206 = sphi 0, %s190
      %s212 = sphi 0, %s214
      %s215 = sphi 0, %s212
      %s216 = sphi 0, %s215
      %s232 = sphi 0, %s216
      %s238 = sphi 0, %s240
      %s241 = sphi 0, %s238
      %s242 = sphi 0, %s241
      %s258 = sphi 0, %s242
    $region4: #{tpu_custom_call.1} parent=1 // loop_header_branch
      %29 = sbr.rel (%p27) target = $region8
    $region5: #{tpu_custom_call.1} parent=1 // loop_body
      %s31 = ssub.s32 %s26, 1
      %s32 = ssub.s32 %s26, 2
      %s39 = sadd.s32 1, %s34
      %p40 = scmp.ge.s32.totalorder %s39, 2
      %s41 = scalar_select %p40, 0, %s39
      %s42 = sadd.s32 1, %s33
      %s43 = scalar_select %p40, %s42, %s33
      %p44 = scmp.ge.s32.totalorder %s43, 2
      %s45 = scalar_select %p44, 0, %s43
      %s46 = ssub.s32 %s33, %s45
      %s47 = ssub.s32 %s34, %s41
      %s48 = sor.u32 %s46, %s47
      %p49 = scmp.eq.s32.totalorder %s48, 0
      %s51 = sadd.s32 %s50, 1
      %s52 = scalar_select %p49, %s50, %s51
      %p55 = pneg %p49
      %p56 = scmp.eq.s32.totalorder %s26, 3
      %p57 = por %p55, %p56
      %p58 = scmp.ne.s32.totalorder %s50, %s53
      %p59 = scmp.eq.s32.totalorder %s26, 0
      %p60 = por %p58, %p59
      %p61 = scmp.ne.s32.totalorder %s50, %s53
      %p62 = scmp.eq.s32.totalorder %s31, 3
      %p63 = por %p61, %p62
      %p64 = scmp.ne.s32.totalorder %s53, %s54
      %p65 = scmp.eq.s32.totalorder %s31, 0
      %p66 = por %p64, %p65
      %p67 = scmp.ne.s32.totalorder %s53, %s54
      %p68 = scmp.eq.s32.totalorder %s32, 3
      %p69 = por %p67, %p68
      %p71 = scmp.ne.s32.totalorder %s54, %s70
      %p72 = scmp.eq.s32.totalorder %s32, 0
      %p73 = por %p71, %p72
      %s75 = sadd.s32 %s74, 1
      %p78 = scmp.eq.s32.totalorder %s26, 3
      %p79 = scmp.ne.s32.totalorder %s74, %s76
      %p80 = scmp.eq.s32.totalorder %s26, 0
      %p81 = por %p79, %p80
      %p82 = scmp.ne.s32.totalorder %s74, %s76
      %p83 = scmp.eq.s32.totalorder %s31, 3
      %p84 = por %p82, %p83
      %p85 = scmp.ne.s32.totalorder %s76, %s77
      %p86 = scmp.eq.s32.totalorder %s31, 0
      %p87 = por %p85, %p86
      %p88 = scmp.ne.s32.totalorder %s76, %s77
      %p89 = scmp.eq.s32.totalorder %s32, 3
      %p90 = por %p88, %p89
      %p92 = scmp.ne.s32.totalorder %s77, %s91
      %p93 = scmp.eq.s32.totalorder %s32, 0
      %p94 = por %p92, %p93
      %s96 = sadd.s32 %s95, 1
      %p99 = scmp.eq.s32.totalorder %s26, 3
      %p100 = scmp.ne.s32.totalorder %s95, %s97
      %p101 = scmp.eq.s32.totalorder %s26, 0
      %p102 = por %p100, %p101
      %p103 = scmp.ne.s32.totalorder %s95, %s97
      %p104 = scmp.eq.s32.totalorder %s31, 3
      %p105 = por %p103, %p104
      %p106 = scmp.ne.s32.totalorder %s97, %s98
      %p107 = scmp.eq.s32.totalorder %s31, 0
      %p108 = por %p106, %p107
      %p109 = scmp.ne.s32.totalorder %s97, %s98
      %p110 = scmp.eq.s32.totalorder %s32, 3
      %p111 = por %p109, %p110
      %p113 = scmp.ne.s32.totalorder %s98, %s112
      %p114 = scmp.eq.s32.totalorder %s32, 0
      %p115 = por %p113, %p114
      %s117 = sadd.s32 %s116, 1
      %p120 = scmp.eq.s32.totalorder %s26, 3
      %p121 = scmp.ne.s32.totalorder %s116, %s118
      %p122 = scmp.eq.s32.totalorder %s26, 0
      %p123 = por %p121, %p122
      %p124 = scmp.ne.s32.totalorder %s116, %s118
      %p125 = scmp.eq.s32.totalorder %s31, 3
      %p126 = por %p124, %p125
      %p127 = scmp.ne.s32.totalorder %s118, %s119
      %p128 = scmp.eq.s32.totalorder %s31, 0
      %p129 = por %p127, %p128
      %p130 = scmp.ne.s32.totalorder %s118, %s119
      %p131 = scmp.eq.s32.totalorder %s32, 3
      %p132 = por %p130, %p131
      %p134 = scmp.ne.s32.totalorder %s119, %s133
      %p135 = scmp.eq.s32.totalorder %s32, 0
      %p136 = por %p134, %p135
      %s138 = sadd.s32 %s137, 1
      %p141 = scmp.eq.s32.totalorder %s26, 3
      %p142 = scmp.ne.s32.totalorder %s137, %s139
      %p143 = scmp.eq.s32.totalorder %s26, 0
      %p144 = por %p142, %p143
      %p145 = scmp.ne.s32.totalorder %s137, %s139
      %p146 = scmp.eq.s32.totalorder %s31, 3
      %p147 = por %p145, %p146
      %p148 = scmp.ne.s32.totalorder %s139, %s140
      %p149 = scmp.eq.s32.totalorder %s31, 0
      %p150 = por %p148, %p149
      %p151 = scmp.ne.s32.totalorder %s139, %s140
      %p152 = scmp.eq.s32.totalorder %s32, 3
      %p153 = por %p151, %p152
      %p155 = scmp.ne.s32.totalorder %s140, %s154
      %p156 = scmp.eq.s32.totalorder %s32, 0
      %p157 = por %p155, %p156
      %s158 = ssub.s32 %s34, %s41
      %p159 = scmp.eq.s32.totalorder %s158, 0
      %s161 = sadd.s32 %s160, 1
      %s162 = scalar_select %p159, %s160, %s161
      %p165 = pneg %p159
      %p166 = scmp.eq.s32.totalorder %s26, 3
      %p167 = por %p165, %p166
      %p168 = scmp.ne.s32.totalorder %s160, %s163
      %p169 = scmp.eq.s32.totalorder %s26, 0
      %p170 = por %p168, %p169
      %p171 = scmp.ne.s32.totalorder %s160, %s163
      %p172 = scmp.eq.s32.totalorder %s31, 3
      %p173 = por %p171, %p172
      %p174 = scmp.ne.s32.totalorder %s163, %s164
      %p175 = scmp.eq.s32.totalorder %s31, 0
      %p176 = por %p174, %p175
      %p177 = scmp.ne.s32.totalorder %s163, %s164
      %p178 = scmp.eq.s32.totalorder %s32, 3
      %p179 = por %p177, %p178
      %p181 = scmp.ne.s32.totalorder %s164, %s180
      %p182 = scmp.eq.s32.totalorder %s32, 0
      %p183 = por %p181, %p182
      %s184 = ssub.s32 %s34, %s41
      %p185 = scmp.eq.s32.totalorder %s184, 0
      %s187 = sadd.s32 %s186, 1
      %s188 = scalar_select %p185, %s186, %s187
      %p191 = pneg %p185
      %p192 = scmp.eq.s32.totalorder %s26, 3
      %p193 = por %p191, %p192
      %p194 = scmp.ne.s32.totalorder %s186, %s189
      %p195 = scmp.eq.s32.totalorder %s26, 0
      %p196 = por %p194, %p195
      %p197 = scmp.ne.s32.totalorder %s186, %s189
      %p198 = scmp.eq.s32.totalorder %s31, 3
      %p199 = por %p197, %p198
      %p200 = scmp.ne.s32.totalorder %s189, %s190
      %p201 = scmp.eq.s32.totalorder %s31, 0
      %p202 = por %p200, %p201
      %p203 = scmp.ne.s32.totalorder %s189, %s190
      %p204 = scmp.eq.s32.totalorder %s32, 3
      %p205 = por %p203, %p204
      %p207 = scmp.ne.s32.totalorder %s190, %s206
      %p208 = scmp.eq.s32.totalorder %s32, 0
      %p209 = por %p207, %p208
      %s210 = ssub.s32 %s33, %s45
      %p211 = scmp.eq.s32.totalorder %s210, 0
      %s213 = sadd.s32 %s212, 1
      %s214 = scalar_select %p211, %s212, %s213
      %p217 = pneg %p211
      %p218 = scmp.eq.s32.totalorder %s26, 3
      %p219 = por %p217, %p218
      %p220 = scmp.ne.s32.totalorder %s212, %s215
      %p221 = scmp.eq.s32.totalorder %s26, 0
      %p222 = por %p220, %p221
      %p223 = scmp.ne.s32.totalorder %s212, %s215
      %p224 = scmp.eq.s32.totalorder %s31, 3
      %p225 = por %p223, %p224
      %p226 = scmp.ne.s32.totalorder %s215, %s216
      %p227 = scmp.eq.s32.totalorder %s31, 0
      %p228 = por %p226, %p227
      %p229 = scmp.ne.s32.totalorder %s215, %s216
      %p230 = scmp.eq.s32.totalorder %s32, 3
      %p231 = por %p229, %p230
      %p233 = scmp.ne.s32.totalorder %s216, %s232
      %p234 = scmp.eq.s32.totalorder %s32, 0
      %p235 = por %p233, %p234
      %s236 = ssub.s32 %s33, %s45
      %p237 = scmp.eq.s32.totalorder %s236, 0
      %s239 = sadd.s32 %s238, 1
      %s240 = scalar_select %p237, %s238, %s239
      %p243 = pneg %p237
      %p244 = scmp.eq.s32.totalorder %s26, 3
      %p245 = por %p243, %p244
      %p246 = scmp.ne.s32.totalorder %s238, %s241
      %p247 = scmp.eq.s32.totalorder %s26, 0
      %p248 = por %p246, %p247
      %p249 = scmp.ne.s32.totalorder %s238, %s241
      %p250 = scmp.eq.s32.totalorder %s31, 3
      %p251 = por %p249, %p250
      %p252 = scmp.ne.s32.totalorder %s241, %s242
      %p253 = scmp.eq.s32.totalorder %s31, 0
      %p254 = por %p252, %p253
      %p255 = scmp.ne.s32.totalorder %s241, %s242
      %p256 = scmp.eq.s32.totalorder %s32, 3
      %p257 = por %p255, %p256
      %p259 = scmp.ne.s32.totalorder %s242, %s258
      %p260 = scmp.eq.s32.totalorder %s32, 0
      %p261 = por %p259, %p260
      %p262 = scmp.le.s32.totalorder 1, %s26
      %p263 = scmp.lt.s32.totalorder %s26, 5
      %p264 = pnand %p262, %p263
      %p265 = pneg %p264
      // Predicated region
      $region9: #{tpu_custom_call.1} parent=5 // pred_check
        _
      $region10: #{tpu_custom_call.1} parent=5 // pred_check_branch
        %267 = sbr.rel (%p264) target = $region12
      $region11: #{tpu_custom_call.1} parent=5 // pred_region
        %s268 = ssub.s32 %s26, 1
        // Predicated region
        $region13: #{tpu_custom_call.1} parent=11 // pred_check
          %p269 = pneg %p87
        $region14: #{tpu_custom_call.1} parent=11 // pred_check_branch
          %271 = sbr.rel (%p269) target = $region16
        $region15: #{tpu_custom_call.1} parent=11 // pred_region
          %s273 = ssub.s32 128, 128
          %274 = vsyncadd [#allocation8], %s273
          %s275 = sshll.u32 [#allocation7], 4
          %s276 = int_to_ptr.vmem [resolvable:$true] %s275
          %281 = dma.hbm_to_vmem [thread:$0]  %s1, 128, %s276, [#allocation8], 64, 64, 4
        $region16: #{tpu_custom_call.1} parent=11 // pred_fallthru
          _
        // Predicated region
        $region17: #{tpu_custom_call.1} parent=11 // pred_check
          %p282 = pneg %p108
        $region18: #{tpu_custom_call.1} parent=11 // pred_check_branch
          %284 = sbr.rel (%p282) target = $region20
        $region19: #{tpu_custom_call.1} parent=11 // pred_region
          %s286 = ssub.s32 128, 128
          %287 = vsyncadd [#allocation8], %s286
          %s288 = sshll.u32 [#allocation9], 4
          %s289 = int_to_ptr.vmem [resolvable:$true] %s288
          %294 = dma.hbm_to_vmem [thread:$0]  %s2, 128, %s289, [#allocation8], 64, 64, 4
        $region20: #{tpu_custom_call.1} parent=11 // pred_fallthru
          _
        // Predicated region
        $region21: #{tpu_custom_call.1} parent=11 // pred_check
          %p295 = pneg %p129
        $region22: #{tpu_custom_call.1} parent=11 // pred_check_branch
          %297 = sbr.rel (%p295) target = $region24
        $region23: #{tpu_custom_call.1} parent=11 // pred_region
          %s299 = ssub.s32 128, 128
          %300 = vsyncadd [#allocation11], %s299
          %s301 = sshll.u32 [#allocation10], 4
          %s302 = int_to_ptr.vmem [resolvable:$true] %s301
          %307 = dma.hbm_to_vmem [thread:$0]  %s3, 128, %s302, [#allocation11], 64, 64, 4
        $region24: #{tpu_custom_call.1} parent=11 // pred_fallthru
          _
        // Predicated region
        $region25: #{tpu_custom_call.1} parent=11 // pred_check
          %p308 = pneg %p150
        $region26: #{tpu_custom_call.1} parent=11 // pred_check_branch
          %310 = sbr.rel (%p308) target = $region28
        $region27: #{tpu_custom_call.1} parent=11 // pred_region
          _
        $region28: #{tpu_custom_call.1} parent=11 // pred_fallthru
          _
      $region12: #{tpu_custom_call.1} parent=5 // pred_fallthru
        _
      %p311 = scmp.lt.s32.totalorder %s26, 4
      // Predicated region
      $region29: #{tpu_custom_call.1} parent=5 // pred_check
        %p312 = pneg %p311
      $region30: #{tpu_custom_call.1} parent=5 // pred_check_branch
        %314 = sbr.rel (%p312) target = $region32
      $region31: #{tpu_custom_call.1} parent=5 // pred_region
        // Predicated region
        $region33: #{tpu_custom_call.1} parent=31 // pred_check
          %p315 = pneg %p60
        $region34: #{tpu_custom_call.1} parent=31 // pred_check_branch
          %317 = sbr.rel (%p315) target = $region36
        $region35: #{tpu_custom_call.1} parent=31 // pred_region
          %s318 = sand.u32 %s50, 1
          %s319 = scalar_lea.sflag [#allocation5], %s318
          %s320 = sand.u32 %s50, 1
          %s321 = smul.addr %s320, 8
          %s322 = scalar_lea.vmem [#allocation4], %s321
          %s324 = ssub.s32 128, 128
          %325 = vsyncadd %s319, %s324
          %s326 = smul.addr %s34, 2
          %s327 = smul.addr %s33, 4
          %s328 = sadd.s32 %s326, %s327
          %s329 = smul.addr %s328, 64
          %s330 = scalar_lea.hbm %s0, %s329
          %s331 = sshll.u32 %s322, 4
          %s332 = int_to_ptr.vmem [resolvable:$true] %s331
          %337 = dma.hbm_to_vmem [thread:$0]  %s330, 128, %s332, %s319, 64, 64, 4
        $region36: #{tpu_custom_call.1} parent=31 // pred_fallthru
          _
        // Predicated region
        $region37: #{tpu_custom_call.1} parent=31 // pred_check
          %p338 = pneg %p170
        $region38: #{tpu_custom_call.1} parent=31 // pred_check_branch
          %340 = sbr.rel (%p338) target = $region40
        $region39: #{tpu_custom_call.1} parent=31 // pred_region
          %p341 = scmp.lt.s32.totalorder %s34, 1
          %s342 = scalar_select %p341, %s34, 1
          %s343 = smul.addr %s342, 2
          %s344 = smul.addr %s343, 4
          %s345 = scalar_lea.vmem %s5, %s344
        $region40: #{tpu_custom_call.1} parent=31 // pred_fallthru
          _
        // Predicated region
        $region41: #{tpu_custom_call.1} parent=31 // pred_check
          %p346 = pneg %p196
        $region42: #{tpu_custom_call.1} parent=31 // pred_check_branch
          %348 = sbr.rel (%p346) target = $region44
        $region43: #{tpu_custom_call.1} parent=31 // pred_region
          %p349 = scmp.lt.s32.totalorder %s34, 1
          %s350 = scalar_select %p349, %s34, 1
          %s351 = smul.addr %s350, 2
          %s352 = smul.addr %s351, 4
          %s353 = scalar_lea.vmem %s6, %s352
        $region44: #{tpu_custom_call.1} parent=31 // pred_fallthru
          _
      $region32: #{tpu_custom_call.1} parent=5 // pred_fallthru
        _
      %p354 = scmp.le.s32.totalorder 1, %s26
      %p355 = scmp.lt.s32.totalorder %s26, 5
      %p356 = pnand %p354, %p355
      %p357 = pneg %p356
      // Predicated region
      $region45: #{tpu_custom_call.1} parent=5 // pred_check
        _
      $region46: #{tpu_custom_call.1} parent=5 // pred_check_branch
        %359 = sbr.rel (%p356) target = $region48
      $region47: #{tpu_custom_call.1} parent=5 // pred_region
        %s360 = ssub.s32 %s26, 1
        %s361 = sand.u32 %s53, 1
        %s362 = scalar_lea.sflag [#allocation5], %s361
        %s363 = sand.u32 %s53, 1
        %s364 = smul.addr %s363, 8
        %s365 = scalar_lea.vmem [#allocation4], %s364
        // Predicated region
        $region49: #{tpu_custom_call.1} parent=47 // pred_check
          %p366 = pneg %p66
        $region50: #{tpu_custom_call.1} parent=47 // pred_check_branch
          %368 = sbr.rel (%p366) target = $region52
        $region51: #{tpu_custom_call.1} parent=47 // pred_region
          %369 = dma.done %s362, 128
        $region52: #{tpu_custom_call.1} parent=47 // pred_fallthru
          _
        // Predicated region
        $region53: #{tpu_custom_call.1} parent=47 // pred_check
          %p370 = pneg %p87
        $region54: #{tpu_custom_call.1} parent=47 // pred_check_branch
          %372 = sbr.rel (%p370) target = $region56
        $region55: #{tpu_custom_call.1} parent=47 // pred_region
          %373 = dma.done [#allocation8], 128
        $region56: #{tpu_custom_call.1} parent=47 // pred_fallthru
          _
        // Predicated region
        $region57: #{tpu_custom_call.1} parent=47 // pred_check
          %p374 = pneg %p108
        $region58: #{tpu_custom_call.1} parent=47 // pred_check_branch
          %376 = sbr.rel (%p374) target = $region60
        $region59: #{tpu_custom_call.1} parent=47 // pred_region
          %377 = dma.done [#allocation8], 128
        $region60: #{tpu_custom_call.1} parent=47 // pred_fallthru
          _
        // Predicated region
        $region61: #{tpu_custom_call.1} parent=47 // pred_check
          %p378 = pneg %p129
        $region62: #{tpu_custom_call.1} parent=47 // pred_check_branch
          %380 = sbr.rel (%p378) target = $region64
        $region63: #{tpu_custom_call.1} parent=47 // pred_region
          %381 = dma.done [#allocation11], 128
        $region64: #{tpu_custom_call.1} parent=47 // pred_fallthru
          _
        %s382 = sand.u32 %s53, 1
        %s383 = scalar_lea.sflag [#allocation5], %s382
        %s384 = sand.u32 %s53, 1
        %s385 = smul.addr %s384, 8
        %s386 = scalar_lea.vmem [#allocation4], %s385
        %p387 = pneg %p66
        %p388 = pneg %p63
        %p389 = pneg %p87
        %p390 = pneg %p84
        %p391 = pneg %p108
        %p392 = pneg %p105
        %p393 = pneg %p129
        %p394 = pneg %p126
        %p395 = pneg %p150
        %p396 = pneg %p147
        %p397 = scmp.lt.s32.totalorder %s36, 1
        %s398 = scalar_select %p397, %s36, 1
        %s399 = smul.addr %s398, 2
        %s400 = smul.addr %s399, 4
        %s401 = scalar_lea.vmem %s5, %s400
        %p402 = pneg %p176
        %p403 = pneg %p173
        %p404 = scmp.lt.s32.totalorder %s36, 1
        %s405 = scalar_select %p404, %s36, 1
        %s406 = smul.addr %s405, 2
        %s407 = smul.addr %s406, 4
        %s408 = scalar_lea.vmem %s6, %s407
        %p409 = pneg %p202
        %p410 = pneg %p199
        %p411 = pneg %p228
        %p412 = pneg %p225
        %s413 = sand.u32 %s215, 1
        %s414 = scalar_lea.sflag [#allocation6], %s413
        %s415 = sand.u32 %s215, 1
        %s416 = smul.addr %s415, 16
        %s417 = scalar_lea.vmem [#allocation12], %s416
        %p418 = pneg %p254
        %p419 = pneg %p251
        %s420 = sand.u32 %s241, 1
        %s421 = scalar_lea.sflag [#allocation14], %s420
        %s422 = sand.u32 %s241, 1
        %s423 = smul.addr %s422, 16
        %s424 = scalar_lea.vmem [#allocation13], %s423
        %p425 = scmp.lt.s32.totalorder %s36, 1
        %s426 = scalar_select %p425, %s36, 1
        %s427 = smul.addr %s426, 2
        %s428 = smul.addr %s427, 4
        %s429 = scalar_lea.vmem %s5, %s428
        %p430 = scmp.lt.s32.totalorder %s36, 1
        %s431 = scalar_select %p430, %s36, 1
        %s432 = smul.addr %s431, 2
        %s433 = smul.addr %s432, 4
        %s434 = scalar_lea.vmem %s6, %s433
        %v436 = vld [vmem:[#allocation7] sm:$0xf]
        %v437 = vld [vmem:[#allocation7 + $0x4] sm:$0xf]
        %v438 = vld [vmem:[#allocation9] sm:$0xf]
        %v439 = vld [vmem:[#allocation9 + $0x4] sm:$0xf]
        %v440 = vld [vmem:[%s365] sm:$0xf]
        %v441 = vld [vmem:[%s365 + $0x4] sm:$0xf]
        %v442 = vld [vmem:[#allocation10] sm:$0xf]
        %v443 = vld [vmem:[#allocation10 + $0x4] sm:$0xf]
        %v446 = vunpack.c.l.b16 %v440
        %v447 = vunpack.c.l.b16 %v441
        %v448 = vpack.c.b16 %v447, %v446
        %v451 = vunpack.c.l.b16 %v442
        %v452 = vunpack.c.l.b16 %v443
        %v453 = vpack.c.b16 %v452, %v451
        %vm455 = vcmask 130048
        %v457 = vsel %vm455, %v448, 0
        %459 = vmatprep.subr.bf16.mxu0 0
        %460 = vmatpush1.bf16.msra.mxu0 0
        %461 = vmatprep.subr.bf16.mxu0 0
        %462 = vmatpush1.bf16.msra.mxu0 0
        %463 = vmatprep.subr.bf16.mxu0 0
        %464 = vmatpush1.bf16.msra.mxu0 0
        %465 = vmatprep.subr.bf16.mxu0 0
        %466 = vmatpush1.bf16.msra.mxu0 0
        %467 = vmatprep.subr.bf16.mxu0 0
        %468 = vmatpush1.bf16.msra.mxu0 0
        %469 = vmatprep.subr.bf16.mxu0 0
        %470 = vmatpush1.bf16.msra.mxu0 0
        %471 = vmatprep.subr.bf16.mxu0 0
        %472 = vmatpush1.bf16.msra.mxu0 0
        %473 = vmatprep.subr.bf16.mxu0 0
        %474 = vmatpush1.bf16.msra.mxu0 %v453
        %475 = vmatprep.subr.bf16.mxu0 0
        %476 = vmatpush2.bf16.msra.mxu0 0
        %477 = vmatprep.subr.bf16.mxu0 0
        %478 = vmatpush2.bf16.msra.mxu0 0
        %479 = vmatprep.subr.bf16.mxu0 0
        %480 = vmatpush2.bf16.msra.mxu0 0
        %481 = vmatprep.subr.bf16.mxu0 0
        %482 = vmatpush2.bf16.msra.mxu0 0
        %483 = vmatprep.subr.bf16.mxu0 0
        %484 = vmatpush2.bf16.msra.mxu0 0
        %485 = vmatprep.subr.bf16.mxu0 0
        %486 = vmatpush2.bf16.msra.mxu0 0
        %487 = vmatprep.subr.bf16.mxu0 0
        %488 = vmatpush2.bf16.msra.mxu0 0
        %489 = vmatprep.subr.bf16.mxu0 0
        %490 = vmatpush2.bf16.msra.mxu0 0
        %491 = vmatprep.mubr.bf16.mxu0 0
        %492 = vmatmul.mubr.bf16.gmra.mxu0 %v457
        %v493 = vpop.f32.mrf.mxu0
        %v494 = vadd.f32 0.0, %v493
        %v495 = vpop.f32.mrf.mxu0
        %v496 = vpop.f32.mrf.mxu0
        %v497 = vadd.f32 0.0, %v496
        %v498 = vpop.f32.mrf.mxu0
        %499 = vdwg.mxu0
        %v500 = vpack.c.bf16 %v497, %v494
        %v503 = vunpack.c.l.b16 %v436
        %v504 = vunpack.c.l.b16 %v437
        %v505 = vpack.c.b16 %v504, %v503
        %v507 = vsel %vm455, %v505, 0
        %509 = vmatprep.subr.bf16.mxu0 0
        %510 = vmatpush1.bf16.msra.mxu0 0
        %511 = vmatprep.subr.bf16.mxu0 0
        %512 = vmatpush1.bf16.msra.mxu0 0
        %513 = vmatprep.subr.bf16.mxu0 0
        %514 = vmatpush1.bf16.msra.mxu0 0
        %515 = vmatprep.subr.bf16.mxu0 0
        %516 = vmatpush1.bf16.msra.mxu0 0
        %517 = vmatprep.subr.bf16.mxu0 0
        %518 = vmatpush1.bf16.msra.mxu0 0
        %519 = vmatprep.subr.bf16.mxu0 0
        %520 = vmatpush1.bf16.msra.mxu0 0
        %521 = vmatprep.subr.bf16.mxu0 0
        %522 = vmatpush1.bf16.msra.mxu0 0
        %523 = vmatprep.subr.bf16.mxu0 0
        %524 = vmatpush1.bf16.msra.mxu0 %v500
        %525 = vmatprep.subr.bf16.mxu0 0
        %526 = vmatpush2.bf16.msra.mxu0 0
        %527 = vmatprep.subr.bf16.mxu0 0
        %528 = vmatpush2.bf16.msra.mxu0 0
        %529 = vmatprep.subr.bf16.mxu0 0
        %530 = vmatpush2.bf16.msra.mxu0 0
        %531 = vmatprep.subr.bf16.mxu0 0
        %532 = vmatpush2.bf16.msra.mxu0 0
        %533 = vmatprep.subr.bf16.mxu0 0
        %534 = vmatpush2.bf16.msra.mxu0 0
        %535 = vmatprep.subr.bf16.mxu0 0
        %536 = vmatpush2.bf16.msra.mxu0 0
        %537 = vmatprep.subr.bf16.mxu0 0
        %538 = vmatpush2.bf16.msra.mxu0 0
        %539 = vmatprep.subr.bf16.mxu0 0
        %540 = vmatpush2.bf16.msra.mxu0 0
        %541 = vmatprep.mubr.bf16.mxu0 0
        %542 = vmatmul.mubr.bf16.gmra.mxu0 %v507
        %v543 = vpop.f32.mrf.mxu0
        %v544 = vadd.f32 0.0, %v543
        %v545 = vpop.f32.mrf.mxu0
        %v546 = vpop.f32.mrf.mxu0
        %v547 = vadd.f32 0.0, %v546
        %v548 = vpop.f32.mrf.mxu0
        %549 = vdwg.mxu0
        %v552 = vunpack.c.l.b16 %v438
        %v553 = vunpack.c.l.b16 %v439
        %v554 = vpack.c.b16 %v553, %v552
        %v556 = vsel %vm455, %v554, 0
        %558 = vmatprep.subr.bf16.mxu0 0
        %559 = vmatpush1.bf16.msra.mxu0 0
        %560 = vmatprep.subr.bf16.mxu0 0
        %561 = vmatpush1.bf16.msra.mxu0 0
        %562 = vmatprep.subr.bf16.mxu0 0
        %563 = vmatpush1.bf16.msra.mxu0 0
        %564 = vmatprep.subr.bf16.mxu0 0
        %565 = vmatpush1.bf16.msra.mxu0 0
        %566 = vmatprep.subr.bf16.mxu0 0
        %567 = vmatpush1.bf16.msra.mxu0 0
        %568 = vmatprep.subr.bf16.mxu0 0
        %569 = vmatpush1.bf16.msra.mxu0 0
        %570 = vmatprep.subr.bf16.mxu0 0
        %571 = vmatpush1.bf16.msra.mxu0 0
        %572 = vmatprep.subr.bf16.mxu0 0
        %573 = vmatpush1.bf16.msra.mxu0 %v500
        %574 = vmatprep.subr.bf16.mxu0 0
        %575 = vmatpush2.bf16.msra.mxu0 0
        %576 = vmatprep.subr.bf16.mxu0 0
        %577 = vmatpush2.bf16.msra.mxu0 0
        %578 = vmatprep.subr.bf16.mxu0 0
        %579 = vmatpush2.bf16.msra.mxu0 0
        %580 = vmatprep.subr.bf16.mxu0 0
        %581 = vmatpush2.bf16.msra.mxu0 0
        %582 = vmatprep.subr.bf16.mxu0 0
        %583 = vmatpush2.bf16.msra.mxu0 0
        %584 = vmatprep.subr.bf16.mxu0 0
        %585 = vmatpush2.bf16.msra.mxu0 0
        %586 = vmatprep.subr.bf16.mxu0 0
        %587 = vmatpush2.bf16.msra.mxu0 0
        %588 = vmatprep.subr.bf16.mxu0 0
        %589 = vmatpush2.bf16.msra.mxu0 0
        %590 = vmatprep.mubr.bf16.mxu0 0
        %591 = vmatmul.mubr.bf16.gmra.mxu0 %v556
        %v592 = vpop.f32.mrf.mxu0
        %v593 = vadd.f32 0.0, %v592
        %v594 = vpop.f32.mrf.mxu0
        %v595 = vpop.f32.mrf.mxu0
        %v596 = vadd.f32 0.0, %v595
        %v597 = vpop.f32.mrf.mxu0
        %598 = vdwg.mxu0
        %601 = vrot.lane.b32.xlu0 %v593, 112
        %v602 = vpop.permute.xlu0 %601
        %603 = vrot.lane.b32.xlu0 %v596, 112
        %v604 = vpop.permute.xlu0 %603
        %v607 = vsub.f32 %v544, %v602
        %v608 = vsub.f32 %v547, %v604
        %611 = vrot.lane.b32.xlu0 %v544, 112
        %v612 = vpop.permute.xlu0 %611
        %613 = vrot.lane.b32.xlu0 %v547, 112
        %v614 = vpop.permute.xlu0 %613
        %v617 = vadd.f32 %v593, %v612
        %v618 = vadd.f32 %v596, %v614
        %621 = vrot.lane.b32.xlu0 %v617, 16
        %v622 = vpop.permute.xlu0 %621
        %623 = vrot.lane.b32.xlu0 %v618, 16
        %v624 = vpop.permute.xlu0 %623
        %v627 = vsel %vm455, %v607, %v622
        %v628 = vsel %vm455, %v608, %v624
        %p629 = scmp.eq.s32.totalorder %s36, 0
        // Predicated region
        $region65: #{tpu_custom_call.1} parent=47 // pred_check
          %p630 = pneg %p629
        $region66: #{tpu_custom_call.1} parent=47 // pred_check_branch
          %632 = sbr.rel (%p630) target = $region68
        $region67: #{tpu_custom_call.1} parent=47 // pred_region
          %vm633 = vcmask 261120
          %634 = vst.msk [vmem:[#allocation2] sm:$0xff] %vm633, 0.0
          %635 = vst.msk [vmem:[#allocation2 + $0x8] sm:$0xff] %vm633, 0.0
          %636 = vst.msk [vmem:[#allocation3] sm:$0xff] %vm633, 0.0
          %637 = vst.msk [vmem:[#allocation3 + $0x8] sm:$0xff] %vm633, 0.0
        $region68: #{tpu_custom_call.1} parent=47 // pred_fallthru
          _
        %v638 = vld [vmem:[#allocation2] sm:$0xff]
        %v639 = vld [vmem:[#allocation2 + $0x8] sm:$0xff]
        %v640 = vld [vmem:[%s429] sm:$0xf]
        %v641 = vld [vmem:[%s429 + $0x4] sm:$0xf]
        %v642 = vunpack.c.l.bf16 %v640
        %v643 = vunpack.c.l.bf16 %v641
        %v644 = vmul.f32 %v642, %v627
        %v645 = vmul.f32 %v643, %v628
        %v646 = vadd.f32 %v638, %v644
        %v647 = vadd.f32 %v639, %v645
        %vm648 = vcmask 261120
        %649 = vst.msk [vmem:[#allocation2] sm:$0xff] %vm648, %v646
        %650 = vst.msk [vmem:[#allocation2 + $0x8] sm:$0xff] %vm648, %v647
        %v651 = vld [vmem:[#allocation3] sm:$0xff]
        %v652 = vld [vmem:[#allocation3 + $0x8] sm:$0xff]
        %v653 = vld [vmem:[%s434] sm:$0xf]
        %v654 = vld [vmem:[%s434 + $0x4] sm:$0xf]
        %v655 = vunpack.c.l.bf16 %v653
        %v656 = vunpack.c.l.bf16 %v654
        %v657 = vmul.f32 %v655, %v627
        %v658 = vmul.f32 %v656, %v628
        %v659 = vadd.f32 %v651, %v657
        %v660 = vadd.f32 %v652, %v658
        %661 = vst.msk [vmem:[#allocation3] sm:$0xff] %vm648, %v659
        %662 = vst.msk [vmem:[#allocation3 + $0x8] sm:$0xff] %vm648, %v660
        %p663 = scmp.eq.s32.totalorder %s36, 1
        // Predicated region
        $region69: #{tpu_custom_call.1} parent=47 // pred_check
          %p664 = pneg %p663
        $region70: #{tpu_custom_call.1} parent=47 // pred_check_branch
          %666 = sbr.rel (%p664) target = $region72
        $region71: #{tpu_custom_call.1} parent=47 // pred_region
          %v667 = vld [vmem:[#allocation2] sm:$0xff]
          %v668 = vld [vmem:[#allocation2 + $0x8] sm:$0xff]
          %v669 = vld [vmem:[#allocation3] sm:$0xff]
          %v670 = vld [vmem:[#allocation3 + $0x8] sm:$0xff]
          %673 = vrot.lane.b32.xlu0 %v669, 32
          %v674 = vpop.permute.xlu0 %673
          %675 = vrot.lane.b32.xlu0 %v670, 32
          %v676 = vpop.permute.xlu0 %675
          %v679 = vsel %vm648, %v667, %v674
          %v680 = vsel %vm648, %v668, %v676
          %v681 = vpack.c.bf16 %v680, %v679
          %682 = vmatprep.subr.bf16.mxu0 0
          %683 = vmatpush1.bf16.msra.mxu0 0
          %684 = vmatprep.subr.bf16.mxu0 0
          %685 = vmatpush1.bf16.msra.mxu0 0
          %686 = vmatprep.subr.bf16.mxu0 0
          %687 = vmatpush1.bf16.msra.mxu0 0
          %688 = vmatprep.subr.bf16.mxu0 0
          %689 = vmatpush1.bf16.msra.mxu0 0
          %690 = vmatprep.subr.bf16.mxu0 0
          %691 = vmatpush1.bf16.msra.mxu0 0
          %692 = vmatprep.subr.bf16.mxu0 0
          %693 = vmatpush1.bf16.msra.mxu0 0
          %694 = vmatprep.subr.bf16.mxu0 0
          %695 = vmatpush1.bf16.msra.mxu0 0
          %696 = vmatprep.subr.bf16.mxu0 0
          %697 = vmatpush1.bf16.msra.mxu0 %v681
          %698 = vmatprep.subr.bf16.mxu0 0
          %699 = vmatpush2.bf16.msra.mxu0 0
          %700 = vmatprep.subr.bf16.mxu0 0
          %701 = vmatpush2.bf16.msra.mxu0 0
          %702 = vmatprep.subr.bf16.mxu0 0
          %703 = vmatpush2.bf16.msra.mxu0 0
          %704 = vmatprep.subr.bf16.mxu0 0
          %705 = vmatpush2.bf16.msra.mxu0 0
          %706 = vmatprep.subr.bf16.mxu0 0
          %707 = vmatpush2.bf16.msra.mxu0 0
          %708 = vmatprep.subr.bf16.mxu0 0
          %709 = vmatpush2.bf16.msra.mxu0 0
          %710 = vmatprep.subr.bf16.mxu0 0
          %711 = vmatpush2.bf16.msra.mxu0 0
          %712 = vmatprep.subr.bf16.mxu0 0
          %713 = vmatpush2.bf16.msra.mxu0 0
          %714 = vmatprep.mubr.bf16.mxu0 0
          %715 = vmatmul.mubr.bf16.gmra.mxu0 %v507
          %v716 = vpop.f32.mrf.mxu0
          %v717 = vadd.f32 0.0, %v716
          %v718 = vpop.f32.mrf.mxu0
          %v719 = vpop.f32.mrf.mxu0
          %v720 = vadd.f32 0.0, %v719
          %v721 = vpop.f32.mrf.mxu0
          %722 = vdwg.mxu0
          %723 = vmatprep.subr.bf16.mxu0 0
          %724 = vmatpush1.bf16.msra.mxu0 0
          %725 = vmatprep.subr.bf16.mxu0 0
          %726 = vmatpush1.bf16.msra.mxu0 0
          %727 = vmatprep.subr.bf16.mxu0 0
          %728 = vmatpush1.bf16.msra.mxu0 0
          %729 = vmatprep.subr.bf16.mxu0 0
          %730 = vmatpush1.bf16.msra.mxu0 0
          %731 = vmatprep.subr.bf16.mxu0 0
          %732 = vmatpush1.bf16.msra.mxu0 0
          %733 = vmatprep.subr.bf16.mxu0 0
          %734 = vmatpush1.bf16.msra.mxu0 0
          %735 = vmatprep.subr.bf16.mxu0 0
          %736 = vmatpush1.bf16.msra.mxu0 0
          %737 = vmatprep.subr.bf16.mxu0 0
          %738 = vmatpush1.bf16.msra.mxu0 %v681
          %739 = vmatprep.subr.bf16.mxu0 0
          %740 = vmatpush2.bf16.msra.mxu0 0
          %741 = vmatprep.subr.bf16.mxu0 0
          %742 = vmatpush2.bf16.msra.mxu0 0
          %743 = vmatprep.subr.bf16.mxu0 0
          %744 = vmatpush2.bf16.msra.mxu0 0
          %745 = vmatprep.subr.bf16.mxu0 0
          %746 = vmatpush2.bf16.msra.mxu0 0
          %747 = vmatprep.subr.bf16.mxu0 0
          %748 = vmatpush2.bf16.msra.mxu0 0
          %749 = vmatprep.subr.bf16.mxu0 0
          %750 = vmatpush2.bf16.msra.mxu0 0
          %751 = vmatprep.subr.bf16.mxu0 0
          %752 = vmatpush2.bf16.msra.mxu0 0
          %753 = vmatprep.subr.bf16.mxu0 0
          %754 = vmatpush2.bf16.msra.mxu0 0
          %755 = vmatprep.mubr.bf16.mxu0 0
          %756 = vmatmul.mubr.bf16.gmra.mxu0 %v556
          %v757 = vpop.f32.mrf.mxu0
          %v758 = vadd.f32 0.0, %v757
          %v759 = vpop.f32.mrf.mxu0
          %v760 = vpop.f32.mrf.mxu0
          %v761 = vadd.f32 0.0, %v760
          %v762 = vpop.f32.mrf.mxu0
          %763 = vdwg.mxu0
          %v764 = vld [vmem:[%s4] sm:$0xf]
          %v765 = vld [vmem:[%s4 + $0x4] sm:$0xf]
          %v766 = vld [vmem:[%s4 + $0x8] sm:$0xf]
          %v767 = vld [vmem:[%s4 + $0xc] sm:$0xf]
          %770 = vrot.lane.b32.xlu0 %v758, 112
          %v771 = vpop.permute.xlu0 %770
          %772 = vrot.lane.b32.xlu0 %v761, 112
          %v773 = vpop.permute.xlu0 %772
          %v776 = vadd.f32 %v717, %v771
          %v777 = vadd.f32 %v720, %v773
          %780 = vrot.lane.b32.xlu0 %v717, 112
          %v781 = vpop.permute.xlu0 %780
          %782 = vrot.lane.b32.xlu0 %v720, 112
          %v783 = vpop.permute.xlu0 %782
          %v786 = vsub.f32 %v758, %v781
          %v787 = vsub.f32 %v761, %v783
          %790 = vrot.lane.b32.xlu0 %v786, 16
          %v791 = vpop.permute.xlu0 %790
          %792 = vrot.lane.b32.xlu0 %v787, 16
          %v793 = vpop.permute.xlu0 %792
          %v796 = vsel %vm455, %v776, %v791
          %v797 = vsel %vm455, %v777, %v793
          %v798 = vpack.c.bf16 %v797, %v796
          %v803 = vunpack.c.l.b16 %v764
          %v804 = vunpack.c.l.b16 %v765
          %v805 = vunpack.c.l.b16 %v766
          %v806 = vunpack.c.l.b16 %v767
          %v807 = vpack.c.b16 %v804, %v803
          %v808 = vpack.c.b16 %v806, %v805
          %v812 = vsel %vm648, %v798, 0
          %814 = vmatprep.subr.bf16.mxu0 0
          %815 = vmatpush1.bf16.msra.mxu0 0
          %816 = vmatprep.subr.bf16.mxu0 0
          %817 = vmatpush1.bf16.msra.mxu0 0
          %818 = vmatprep.subr.bf16.mxu0 0
          %819 = vmatpush1.bf16.msra.mxu0 0
          %820 = vmatprep.subr.bf16.mxu0 0
          %821 = vmatpush1.bf16.msra.mxu0 0
          %822 = vmatprep.subr.bf16.mxu0 0
          %823 = vmatpush1.bf16.msra.mxu0 0
          %824 = vmatprep.subr.bf16.mxu0 0
          %825 = vmatpush1.bf16.msra.mxu0 0
          %826 = vmatprep.subr.bf16.mxu0 0
          %827 = vmatpush1.bf16.msra.mxu0 %v808
          %828 = vmatprep.subr.bf16.mxu0 0
          %829 = vmatpush1.bf16.msra.mxu0 %v807
          %830 = vmatprep.subr.bf16.mxu0 0
          %831 = vmatpush2.bf16.msra.mxu0 0
          %832 = vmatprep.subr.bf16.mxu0 0
          %833 = vmatpush2.bf16.msra.mxu0 0
          %834 = vmatprep.subr.bf16.mxu0 0
          %835 = vmatpush2.bf16.msra.mxu0 0
          %836 = vmatprep.subr.bf16.mxu0 0
          %837 = vmatpush2.bf16.msra.mxu0 0
          %838 = vmatprep.subr.bf16.mxu0 0
          %839 = vmatpush2.bf16.msra.mxu0 0
          %840 = vmatprep.subr.bf16.mxu0 0
          %841 = vmatpush2.bf16.msra.mxu0 0
          %842 = vmatprep.subr.bf16.mxu0 0
          %843 = vmatpush2.bf16.msra.mxu0 0
          %844 = vmatprep.subr.bf16.mxu0 0
          %845 = vmatpush2.bf16.msra.mxu0 0
          %846 = vmatprep.mubr.bf16.mxu0 0
          %847 = vmatmul.mubr.bf16.gmra.mxu0 %v812
          %v848 = vpop.f32.mrf.mxu0
          %v849 = vadd.f32 0.0, %v848
          %v850 = vpop.f32.mrf.mxu0
          %v851 = vpop.f32.mrf.mxu0
          %v852 = vadd.f32 0.0, %v851
          %v853 = vpop.f32.mrf.mxu0
          %854 = vdwg.mxu0
          %855 = vst.msk [vmem:[%s417] sm:$0xff] %vm455, %v849
          %856 = vst.msk [vmem:[%s417 + $0x8] sm:$0xff] %vm455, %v852
          %859 = vrot.lane.b32.xlu0 %v776, 96
          %v860 = vpop.permute.xlu0 %859
          %861 = vrot.lane.b32.xlu0 %v777, 96
          %v862 = vpop.permute.xlu0 %861
          %865 = vrot.lane.b32.xlu0 %v786, 112
          %v866 = vpop.permute.xlu0 %865
          %867 = vrot.lane.b32.xlu0 %v787, 112
          %v868 = vpop.permute.xlu0 %867
          %v871 = vsel %vm455, %v860, %v866
          %v872 = vsel %vm455, %v862, %v868
          %v873 = vpack.c.bf16 %v872, %v871
          %v875 = vsel %vm648, %v873, 0
          %877 = vmatprep.subr.bf16.mxu0 0
          %878 = vmatpush1.bf16.msra.mxu0 0
          %879 = vmatprep.subr.bf16.mxu0 0
          %880 = vmatpush1.bf16.msra.mxu0 0
          %881 = vmatprep.subr.bf16.mxu0 0
          %882 = vmatpush1.bf16.msra.mxu0 0
          %883 = vmatprep.subr.bf16.mxu0 0
          %884 = vmatpush1.bf16.msra.mxu0 0
          %885 = vmatprep.subr.bf16.mxu0 0
          %886 = vmatpush1.bf16.msra.mxu0 0
          %887 = vmatprep.subr.bf16.mxu0 0
          %888 = vmatpush1.bf16.msra.mxu0 0
          %889 = vmatprep.subr.bf16.mxu0 0
          %890 = vmatpush1.bf16.msra.mxu0 %v808
          %891 = vmatprep.subr.bf16.mxu0 0
          %892 = vmatpush1.bf16.msra.mxu0 %v807
          %893 = vmatprep.subr.bf16.mxu0 0
          %894 = vmatpush2.bf16.msra.mxu0 0
          %895 = vmatprep.subr.bf16.mxu0 0
          %896 = vmatpush2.bf16.msra.mxu0 0
          %897 = vmatprep.subr.bf16.mxu0 0
          %898 = vmatpush2.bf16.msra.mxu0 0
          %899 = vmatprep.subr.bf16.mxu0 0
          %900 = vmatpush2.bf16.msra.mxu0 0
          %901 = vmatprep.subr.bf16.mxu0 0
          %902 = vmatpush2.bf16.msra.mxu0 0
          %903 = vmatprep.subr.bf16.mxu0 0
          %904 = vmatpush2.bf16.msra.mxu0 0
          %905 = vmatprep.subr.bf16.mxu0 0
          %906 = vmatpush2.bf16.msra.mxu0 0
          %907 = vmatprep.subr.bf16.mxu0 0
          %908 = vmatpush2.bf16.msra.mxu0 0
          %909 = vmatprep.mubr.bf16.mxu0 0
          %910 = vmatmul.mubr.bf16.gmra.mxu0 %v875
          %v911 = vpop.f32.mrf.mxu0
          %v912 = vadd.f32 0.0, %v911
          %v913 = vpop.f32.mrf.mxu0
          %v914 = vpop.f32.mrf.mxu0
          %v915 = vadd.f32 0.0, %v914
          %v916 = vpop.f32.mrf.mxu0
          %917 = vdwg.mxu0
          %918 = vst.msk [vmem:[%s424] sm:$0xff] %vm455, %v912
          %919 = vst.msk [vmem:[%s424 + $0x8] sm:$0xff] %vm455, %v915
        $region72: #{tpu_custom_call.1} parent=47 // pred_fallthru
          _
        %s920 = sand.u32 %s215, 1
        %s921 = scalar_lea.sflag [#allocation6], %s920
        %s922 = sand.u32 %s215, 1
        %s923 = smul.addr %s922, 16
        %s924 = scalar_lea.vmem [#allocation12], %s923
        %s925 = sand.u32 %s241, 1
        %s926 = scalar_lea.sflag [#allocation14], %s925
        %s927 = sand.u32 %s241, 1
        %s928 = smul.addr %s927, 16
        %s929 = scalar_lea.vmem [#allocation13], %s928
        // Predicated region
        $region73: #{tpu_custom_call.1} parent=47 // pred_check
          %p930 = pneg %p225
        $region74: #{tpu_custom_call.1} parent=47 // pred_check_branch
          %932 = sbr.rel (%p930) target = $region76
        $region75: #{tpu_custom_call.1} parent=47 // pred_region
          %s934 = ssub.s32 256, 256
          %935 = vsyncadd %s921, %s934
          %s936 = smul.addr %s35, 2
          %s937 = smul.addr %s936, 128
          %s938 = scalar_lea.hbm %s7, %s937
          %s939 = sshll.u32 %s924, 4
          %s940 = int_to_ptr.vmem [resolvable:$true] %s939
          %945 = dma.vmem_to_hbm [thread:$0]  %s940, 256, %s938, %s921, 128, 128, 8
        $region76: #{tpu_custom_call.1} parent=47 // pred_fallthru
          _
        // Predicated region
        $region77: #{tpu_custom_call.1} parent=47 // pred_check
          %p946 = pneg %p251
        $region78: #{tpu_custom_call.1} parent=47 // pred_check_branch
          %948 = sbr.rel (%p946) target = $region80
        $region79: #{tpu_custom_call.1} parent=47 // pred_region
          %s950 = ssub.s32 256, 256
          %951 = vsyncadd %s926, %s950
          %s952 = smul.addr %s35, 2
          %s953 = smul.addr %s952, 128
          %s954 = scalar_lea.hbm %s8, %s953
          %s955 = sshll.u32 %s929, 4
          %s956 = int_to_ptr.vmem [resolvable:$true] %s955
          %961 = dma.vmem_to_hbm [thread:$0]  %s956, 256, %s954, %s926, 128, 128, 8
        $region80: #{tpu_custom_call.1} parent=47 // pred_fallthru
          _
      $region48: #{tpu_custom_call.1} parent=5 // pred_fallthru
        _
      %p962 = scmp.le.s32.totalorder 2, %s26
      // Predicated region
      $region81: #{tpu_custom_call.1} parent=5 // pred_check
        %p963 = pneg %p962
      $region82: #{tpu_custom_call.1} parent=5 // pred_check_branch
        %965 = sbr.rel (%p963) target = $region84
      $region83: #{tpu_custom_call.1} parent=5 // pred_region
        %s966 = ssub.s32 %s26, 2
        // Predicated region
        $region85: #{tpu_custom_call.1} parent=83 // pred_check
          %p967 = pneg %p231
        $region86: #{tpu_custom_call.1} parent=83 // pred_check_branch
          %969 = sbr.rel (%p967) target = $region88
        $region87: #{tpu_custom_call.1} parent=83 // pred_region
          %s970 = sand.u32 %s216, 1
          %s971 = scalar_lea.sflag [#allocation6], %s970
          %s972 = sand.u32 %s216, 1
          %s973 = smul.addr %s972, 16
          %s974 = scalar_lea.vmem [#allocation12], %s973
          %975 = dma.done %s971, 256
        $region88: #{tpu_custom_call.1} parent=83 // pred_fallthru
          _
        // Predicated region
        $region89: #{tpu_custom_call.1} parent=83 // pred_check
          %p976 = pneg %p257
        $region90: #{tpu_custom_call.1} parent=83 // pred_check_branch
          %978 = sbr.rel (%p976) target = $region92
        $region91: #{tpu_custom_call.1} parent=83 // pred_region
          %s979 = sand.u32 %s242, 1
          %s980 = scalar_lea.sflag [#allocation14], %s979
          %s981 = sand.u32 %s242, 1
          %s982 = smul.addr %s981, 16
          %s983 = scalar_lea.vmem [#allocation13], %s982
          %984 = dma.done %s980, 256
        $region92: #{tpu_custom_call.1} parent=83 // pred_fallthru
          _
      $region84: #{tpu_custom_call.1} parent=5 // pred_fallthru
        _
    $region6: #{tpu_custom_call.1} parent=1 // loop_footer
      %s30 = sadd.s32 1, %s26
    $region7: #{tpu_custom_call.1} parent=1 // loop_footer_branch
      %25 = sbr.rel target = $region3
    $region8: #{tpu_custom_call.1} parent=1 // loop_exit
      _
    %985 = vsyncpa [#allocation5], 1
    %s986 = scalar_lea.sflag [#allocation5], 1
    %987 = vsyncpa %s986, 1
    %988 = vsyncpa [#allocation8], 1
    %989 = vsyncpa [#allocation11], 1
    %990 = vsyncpa [#allocation6], 1
    %s991 = scalar_lea.sflag [#allocation6], 1
    %992 = vsyncpa %s991, 1
    %993 = vsyncpa [#allocation14], 1
    %s994 = scalar_lea.sflag [#allocation14], 1
    %995 = vsyncpa %s994, 1

</llo_original>
